<compile_context>
chip_gen: v5e
topology: v5e:2x2
jax: 0.10.0
libtpu: 0.0.40
codegen_flags: <defaults>
</compile_context>

<pallas_src>
import math

import jax
import jax.numpy as jnp
from jax.experimental import pallas as pl
from jax.experimental.pallas import tpu as pltpu  # noqa: F401  (kept for TPU-specific tuning hooks)

# -------------------- model hyper-parameters (small, deterministic) -----------
VOCAB = 50
D_MODEL = 32
N_LAYERS = 2
N_HEADS = 4
D_HEAD = D_MODEL // N_HEADS
D_FF = 64
SEQ = 8
BATCH = 2
BS = BATCH * SEQ
EPS = 1e-5   # nn.LayerNorm default


# -------------------- in-kernel helpers ---------------------------------------
def _ln(x):
    """LayerNorm without affine (gamma/beta are folded into the following matmul)."""
    mu = jnp.mean(x, axis=-1, keepdims=True)
    var = jnp.mean((x - mu) ** 2, axis=-1, keepdims=True)
    return (x - mu) * jax.lax.rsqrt(var + EPS)


# -------------------- fused Pallas kernel --------------------------------------
def encoder_fused_kernel(src_ref, mask_ref, emb_ref, pe_ref,
                         wqkv_ref, wo_ref, w1_ref, w2_ref,
                         bqkv_ref, bo_ref, b1_ref, b2_ref, lnf_ref,
                         o_ref):
    B, S, D, H, DH, F = BATCH, SEQ, D_MODEL, N_HEADS, D_HEAD, D_FF

    # ---- Embedding lookup fused in-kernel as a one-hot matmul on the MXU ----
    # src_ref: (B*S, 1) int32 ; emb_ref: (VOCAB, D), already scaled by sqrt(d_model).
    onehot = (jax.lax.broadcasted_iota(jnp.int32, (BS, VOCAB), 1)
              == src_ref[...]).astype(jnp.float32)
    x = jnp.dot(onehot, emb_ref[...], preferred_element_type=jnp.float32)
    x = x + pe_ref[...]                                   # PE pre-tiled to (B*S, D)

    # Key-padding mask -> additive bias, computed ONCE for all layers/heads.
    # Convention (tutorial-style Encoder): mask == 0 means "pad / do not attend".
    neg = jnp.where(mask_ref[...] == 0, jnp.float32(-1e9), jnp.float32(0.0))  # (B,1,S)

    for l in range(N_LAYERS):                             # static unroll over layers
        # ---- self-attention sub-block (pre-norm + residual) ----
        x2 = _ln(x)                                       # affine folded into Wqkv/bqkv
        qkv = jnp.dot(x2, wqkv_ref[l],
                      preferred_element_type=jnp.float32) + bqkv_ref[l]
        q = qkv[:, :D]                                    # 1/sqrt(d_head) folded into Wq
        k = qkv[:, D:2 * D]
        v = qkv[:, 2 * D:]

        heads = []
        for h in range(H):                                # static unroll, H = 4
            cs = h * DH
            qh = q[:, cs:cs + DH].reshape(B, S, DH)
            kh = k[:, cs:cs + DH].reshape(B, S, DH)
            vh = v[:, cs:cs + DH].reshape(B, S, DH)
            s = jnp.einsum('bqd,bkd->bqk', qh, kh,
                           preferred_element_type=jnp.float32) + neg
            s = s - jnp.max(s, axis=-1, keepdims=True)    # stable softmax
            p = jnp.exp(s)
            p = p / jnp.sum(p, axis=-1, keepdims=True)    # exact divide (8 elements/row)
            ctx_h = jnp.einsum('bqk,bkd->bqd', p, vh,
                               preferred_element_type=jnp.float32)
            heads.append(ctx_h.reshape(BS, DH))           # stays in registers
        ctx = jnp.concatenate(heads, axis=-1)             # (B*S, D)

        x = x + jnp.dot(ctx, wo_ref[l],
                        preferred_element_type=jnp.float32) + bo_ref[l]

        # ---- feed-forward sub-block (pre-norm + residual) ----
        x2 = _ln(x)                                       # affine folded into W1/b1
        h1 = jnp.maximum(
            jnp.dot(x2, w1_ref[l], preferred_element_type=jnp.float32) + b1_ref[l],
            0.0)
        x = x + jnp.dot(h1, w2_ref[l],
                        preferred_element_type=jnp.float32) + b2_ref[l]

    # ---- final LayerNorm (affine kept) ----
    o_ref[...] = _ln(x) * lnf_ref[0] + lnf_ref[1]


# -------------------- wrapper ---------------------------------------------------
@jax.jit
def run_encoder(src, mask, params):
    # (B, S) -> (B*S, 1): metadata-only reshape in XLA; gather happens in-kernel.
    src_col = src.reshape(BS, 1)

    out = pl.pallas_call(
        encoder_fused_kernel,
        out_shape=jax.ShapeDtypeStruct((BS, D_MODEL), jnp.float32),
        # NOTE(v7x): at B*S = 16 a grid would only add per-step overhead; if batch/seq
        # ever scale, add a leading "parallel" grid axis to shard across the 2 TCs.
    )(src_col, mask, params["emb"], params["pe"],
      params["wqkv"], params["wo"], params["w1"], params["w2"],
      params["bqkv"], params["bo"], params["b1"], params["b2"], params["lnf"])

    return out.reshape(BATCH, SEQ, D_MODEL)


# -------------------- deterministic parameter init + algebraic folds -----------
def init_params(key):
    keys = jax.random.split(key, 2 + N_LAYERS)
    inv_sqrt_dh = 1.0 / math.sqrt(D_HEAD)

    embedding = jax.random.normal(keys[0], (VOCAB, D_MODEL), jnp.float32) * 0.02

    # sinusoidal positional encoding ("Attention Is All You Need")
    pos = jnp.arange(SEQ, dtype=jnp.float32)[:, None]
    i = jnp.arange(D_MODEL // 2, dtype=jnp.float32)[None, :]
    angle = pos / jnp.power(10000.0, (2.0 * i) / D_MODEL)
    pe = jnp.zeros((SEQ, D_MODEL), jnp.float32)
    pe = pe.at[:, 0::2].set(jnp.sin(angle))
    pe = pe.at[:, 1::2].set(jnp.cos(angle))

    def lin(k, fan_in, shape):
        bound = 1.0 / math.sqrt(fan_in)
        return jax.random.uniform(k, shape, jnp.float32, -bound, bound)

    wqkv, wo, w1, w2 = [], [], [], []
    bqkv, bo, b1, b2 = [], [], [], []
    for l in range(N_LAYERS):
        lk = jax.random.split(keys[2 + l], 6)
        wq = lin(lk[0], D_MODEL, (D_MODEL, D_MODEL))
        wk = lin(lk[1], D_MODEL, (D_MODEL, D_MODEL))
        wv = lin(lk[2], D_MODEL, (D_MODEL, D_MODEL))
        wo_l = lin(lk[3], D_MODEL, (D_MODEL, D_MODEL))
        w1_l = lin(lk[4], D_MODEL, (D_MODEL, D_FF))
        w2_l = lin(lk[5], D_FF, (D_FF, D_MODEL))
        bq = jnp.zeros((D_MODEL,), jnp.float32)
        bk = jnp.zeros((D_MODEL,), jnp.float32)
        bv = jnp.zeros((D_MODEL,), jnp.float32)
        bo_l = jnp.zeros((D_MODEL,), jnp.float32)
        b1_l = jnp.zeros((D_FF,), jnp.float32)
        b2_l = jnp.zeros((D_MODEL,), jnp.float32)
        # LayerNorm affine params (PyTorch init: gamma = 1, beta = 0)
        g1 = jnp.ones((D_MODEL,), jnp.float32)
        be1 = jnp.zeros((D_MODEL,), jnp.float32)
        g2 = jnp.ones((D_MODEL,), jnp.float32)
        be2 = jnp.zeros((D_MODEL,), jnp.float32)

        # Fold LN1 affine into Wq/Wk/Wv, and 1/sqrt(d_head) into Wq/bq:
        #   LN(x) @ W + b  ==  norm(x) @ (gamma[:,None] * W) + (beta @ W + b)
        wq_e = (g1[:, None] * wq) * inv_sqrt_dh
        bq_e = (be1 @ wq + bq) * inv_sqrt_dh
        wk_e = g1[:, None] * wk
        bk_e = be1 @ wk + bk
        wv_e = g1[:, None] * wv
        bv_e = be1 @ wv + bv
        wqkv.append(jnp.concatenate([wq_e, wk_e, wv_e], axis=1))       # (D, 3D)
        bqkv.append(jnp.concatenate([bq_e, bk_e, bv_e])[None, :])      # (1, 3D)

        wo.append(wo_l)
        bo.append(bo_l[None, :])                                       # (1, D)

        # Fold LN2 affine into W1/b1:
        w1.append(g2[:, None] * w1_l)
        b1.append((be2 @ w1_l + b1_l)[None, :])                        # (1, F)
        w2.append(w2_l)
        b2.append(b2_l[None, :])                                       # (1, D)

    gf = jnp.ones((1, D_MODEL), jnp.float32)
    bf = jnp.zeros((1, D_MODEL), jnp.float32)

    return {
        "emb": embedding * jnp.float32(math.sqrt(D_MODEL)),  # x*sqrt(d_model) folded
        "pe": jnp.tile(pe, (BATCH, 1)),                      # (B*S, D)
        "wqkv": jnp.stack(wqkv),                             # (L, D, 3D)
        "wo": jnp.stack(wo),                                 # (L, D, D)
        "w1": jnp.stack(w1),                                 # (L, D, D_FF)
        "w2": jnp.stack(w2),                                 # (L, D_FF, D)
        "bqkv": jnp.stack(bqkv),                             # (L, 1, 3D)
        "bo": jnp.stack(bo),                                 # (L, 1, D)
        "b1": jnp.stack(b1),                                 # (L, 1, D_FF)
        "b2": jnp.stack(b2),                                 # (L, 1, D)
        "lnf": jnp.stack([gf, bf]),                          # (2, 1, D) final LN affine
    }


# -------------------- main ------------------------------------------------------
if __name__ == "__main__":
    key = jax.random.PRNGKey(0)
    pkey, skey = jax.random.split(key)
    params = init_params(pkey)

    src = jax.random.randint(skey, (BATCH, SEQ), 0, VOCAB, dtype=jnp.int32)
    # padding mask: sequence 0 is full length, sequence 1 masks last 3 positions
    lengths = jnp.array([SEQ, SEQ - 3], dtype=jnp.int32)
    mask = (jnp.arange(SEQ)[None, :] < lengths[:, None]).astype(jnp.int32)
    mask = mask[:, None, :]                                  # (B, 1, S); 0 = pad

    out = jax.block_until_ready(run_encoder(src, mask, params))

    assert out.shape == (BATCH, SEQ, D_MODEL), out.shape
    assert bool(jnp.all(jnp.isfinite(out)))
    print("KERNEL_OK")
</pallas_src>

<mosaic_0001>
module attributes {stable_mosaic.version = 11 : i64} {
  func.func @encoder_fused_kernel(%arg0: memref<16x1xi32, #tpu.memory_space<vmem>>, %arg1: memref<2x1x8xi32, #tpu.memory_space<vmem>>, %arg2: memref<50x32xf32, #tpu.memory_space<vmem>>, %arg3: memref<16x32xf32, #tpu.memory_space<vmem>>, %arg4: memref<2x32x96xf32, #tpu.memory_space<vmem>>, %arg5: memref<2x32x32xf32, #tpu.memory_space<vmem>>, %arg6: memref<2x32x64xf32, #tpu.memory_space<vmem>>, %arg7: memref<2x64x32xf32, #tpu.memory_space<vmem>>, %arg8: memref<2x1x96xf32, #tpu.memory_space<vmem>>, %arg9: memref<2x1x32xf32, #tpu.memory_space<vmem>>, %arg10: memref<2x1x64xf32, #tpu.memory_space<vmem>>, %arg11: memref<2x1x32xf32, #tpu.memory_space<vmem>>, %arg12: memref<2x1x32xf32, #tpu.memory_space<vmem>>, %arg13: memref<16x32xf32, #tpu.memory_space<vmem>>) attributes {dimension_semantics = [], scalar_prefetch = 0 : i64, scratch_operands = 0 : i64, tpu.core_type = #tpu.core_type<tc>} {
    %0 = tpu.iota {dimensions = array<i32: 1>} : vector<16x50xi32>
    %c0 = arith.constant 0 : index
    %c0_0 = arith.constant 0 : index
    %1 = vector.load %arg0[%c0, %c0_0] : memref<16x1xi32, #tpu.memory_space<vmem>>, vector<16x1xi32>
    %2 = vector.broadcast %1 : vector<16x1xi32> to vector<16x50xi32>
    %3 = arith.cmpi eq, %0, %2 : vector<16x50xi32>
    %4 = arith.extui %3 : vector<16x50xi1> to vector<16x50xi32>
    %5 = arith.sitofp %4 : vector<16x50xi32> to vector<16x50xf32>
    %c0_1 = arith.constant 0 : index
    %c0_2 = arith.constant 0 : index
    %6 = vector.load %arg2[%c0_1, %c0_2] : memref<50x32xf32, #tpu.memory_space<vmem>>, vector<50x32xf32>
    %cst = arith.constant dense<0.000000e+00> : vector<16x32xf32>
    %7 = tpu.matmul %5, %6, %cst {dimension_numbers = #tpu.dot_dimension_numbers<[1], [0], [0], [1], [0, 0, 1, 1], [], []>} : vector<16x50xf32>, vector<50x32xf32>, vector<16x32xf32> -> vector<16x32xf32>
    %c0_3 = arith.constant 0 : index
    %c0_4 = arith.constant 0 : index
    %8 = vector.load %arg3[%c0_3, %c0_4] : memref<16x32xf32, #tpu.memory_space<vmem>>, vector<16x32xf32>
    %9 = arith.addf %7, %8 : vector<16x32xf32>
    %c0_5 = arith.constant 0 : index
    %c0_6 = arith.constant 0 : index
    %c0_7 = arith.constant 0 : index
    %10 = vector.load %arg1[%c0_5, %c0_6, %c0_7] : memref<2x1x8xi32, #tpu.memory_space<vmem>>, vector<2x1x8xi32>
    %c0_i32 = arith.constant 0 : i32
    %11 = vector.broadcast %c0_i32 : i32 to vector<2x1x8xi32>
    %12 = arith.cmpi eq, %10, %11 : vector<2x1x8xi32>
    %cst_8 = arith.constant -1.000000e+09 : f32
    %cst_9 = arith.constant 0.000000e+00 : f32
    %13 = vector.broadcast %cst_8 : f32 to vector<2x1x8xf32>
    %14 = vector.broadcast %cst_9 : f32 to vector<2x1x8xf32>
    %15 = arith.select %12, %13, %14 : vector<2x1x8xi1>, vector<2x1x8xf32>
    %cst_10 = arith.constant dense<0.000000e+00> : vector<16xf32>
    %16 = vector.multi_reduction <add>, %9, %cst_10 [1] : vector<16x32xf32> to vector<16xf32>
    %17 = vector.shape_cast %16 : vector<16xf32> to vector<16x1xf32>
    %cst_11 = arith.constant 3.200000e+01 : f32
    %18 = vector.broadcast %cst_11 : f32 to vector<16x1xf32>
    %19 = arith.divf %17, %18 : vector<16x1xf32>
    %20 = vector.broadcast %19 : vector<16x1xf32> to vector<16x32xf32>
    %21 = arith.subf %9, %20 : vector<16x32xf32>
    %22 = arith.mulf %21, %21 : vector<16x32xf32>
    %cst_12 = arith.constant dense<0.000000e+00> : vector<16xf32>
    %23 = vector.multi_reduction <add>, %22, %cst_12 [1] : vector<16x32xf32> to vector<16xf32>
    %24 = vector.shape_cast %23 : vector<16xf32> to vector<16x1xf32>
    %cst_13 = arith.constant 3.200000e+01 : f32
    %25 = vector.broadcast %cst_13 : f32 to vector<16x1xf32>
    %26 = arith.divf %24, %25 : vector<16x1xf32>
    %27 = vector.broadcast %19 : vector<16x1xf32> to vector<16x32xf32>
    %28 = arith.subf %9, %27 : vector<16x32xf32>
    %cst_14 = arith.constant 9.99999974E-6 : f32
    %29 = vector.broadcast %cst_14 : f32 to vector<16x1xf32>
    %30 = arith.addf %26, %29 : vector<16x1xf32>
    %31 = math.rsqrt %30 : vector<16x1xf32>
    %32 = vector.broadcast %31 : vector<16x1xf32> to vector<16x32xf32>
    %33 = arith.mulf %28, %32 : vector<16x32xf32>
    %c0_15 = arith.constant 0 : index
    %c0_16 = arith.constant 0 : index
    %c0_17 = arith.constant 0 : index
    %34 = vector.load %arg4[%c0_15, %c0_16, %c0_17] : memref<2x32x96xf32, #tpu.memory_space<vmem>>, vector<1x32x96xf32>
    %35 = vector.shape_cast %34 : vector<1x32x96xf32> to vector<32x96xf32>
    %cst_18 = arith.constant dense<0.000000e+00> : vector<16x96xf32>
    %36 = tpu.matmul %33, %35, %cst_18 {dimension_numbers = #tpu.dot_dimension_numbers<[1], [0], [0], [1], [0, 0, 1, 1], [], []>} : vector<16x32xf32>, vector<32x96xf32>, vector<16x96xf32> -> vector<16x96xf32>
    %c0_19 = arith.constant 0 : index
    %c0_20 = arith.constant 0 : index
    %c0_21 = arith.constant 0 : index
    %37 = vector.load %arg8[%c0_19, %c0_20, %c0_21] : memref<2x1x96xf32, #tpu.memory_space<vmem>>, vector<1x1x96xf32>
    %38 = vector.shape_cast %37 : vector<1x1x96xf32> to vector<1x96xf32>
    %39 = vector.broadcast %38 : vector<1x96xf32> to vector<16x96xf32>
    %40 = arith.addf %36, %39 : vector<16x96xf32>
    %41 = vector.extract_strided_slice %40 {offsets = [0, 0], sizes = [16, 32], strides = [1, 1]} : vector<16x96xf32> to vector<16x32xf32>
    %42 = vector.extract_strided_slice %40 {offsets = [0, 32], sizes = [16, 32], strides = [1, 1]} : vector<16x96xf32> to vector<16x32xf32>
    %43 = vector.extract_strided_slice %40 {offsets = [0, 64], sizes = [16, 32], strides = [1, 1]} : vector<16x96xf32> to vector<16x32xf32>
    %44 = vector.extract_strided_slice %41 {offsets = [0, 0], sizes = [16, 8], strides = [1, 1]} : vector<16x32xf32> to vector<16x8xf32>
    %45 = vector.shape_cast %44 : vector<16x8xf32> to vector<2x8x8xf32>
    %46 = vector.extract_strided_slice %42 {offsets = [0, 0], sizes = [16, 8], strides = [1, 1]} : vector<16x32xf32> to vector<16x8xf32>
    %47 = vector.shape_cast %46 : vector<16x8xf32> to vector<2x8x8xf32>
    %48 = vector.extract_strided_slice %43 {offsets = [0, 0], sizes = [16, 8], strides = [1, 1]} : vector<16x32xf32> to vector<16x8xf32>
    %49 = vector.shape_cast %48 : vector<16x8xf32> to vector<2x8x8xf32>
    "tpu.trace_start"() <{level = 10 : i32, message = "bqd,bkd->bqk"}> : () -> ()
    %cst_22 = arith.constant dense<0.000000e+00> : vector<2x8x8xf32>
    %50 = tpu.matmul %45, %47, %cst_22 {dimension_numbers = #tpu.dot_dimension_numbers<[2], [2], [1], [1], [0, 0, 0, 1, 1, 1], [0], [0]>} : vector<2x8x8xf32>, vector<2x8x8xf32>, vector<2x8x8xf32> -> vector<2x8x8xf32>
    "tpu.trace_stop"() : () -> ()
    %51 = vector.broadcast %15 : vector<2x1x8xf32> to vector<2x8x8xf32>
    %52 = arith.addf %50, %51 : vector<2x8x8xf32>
    %cst_23 = arith.constant dense<0xFF800000> : vector<2x8xf32>
    %53 = vector.multi_reduction <maximumf>, %52, %cst_23 [2] : vector<2x8x8xf32> to vector<2x8xf32>
    %54 = vector.shape_cast %53 : vector<2x8xf32> to vector<2x8x1xf32>
    %55 = vector.broadcast %54 : vector<2x8x1xf32> to vector<2x8x8xf32>
    %56 = arith.subf %52, %55 : vector<2x8x8xf32>
    %57 = math.exp %56 : vector<2x8x8xf32>
    %cst_24 = arith.constant dense<0.000000e+00> : vector<2x8xf32>
    %58 = vector.multi_reduction <add>, %57, %cst_24 [2] : vector<2x8x8xf32> to vector<2x8xf32>
    %59 = vector.shape_cast %58 : vector<2x8xf32> to vector<2x8x1xf32>
    %60 = vector.broadcast %59 : vector<2x8x1xf32> to vector<2x8x8xf32>
    %61 = arith.divf %57, %60 : vector<2x8x8xf32>
    "tpu.trace_start"() <{level = 10 : i32, message = "bqk,bkd->bqd"}> : () -> ()
    %cst_25 = arith.constant dense<0.000000e+00> : vector<2x8x8xf32>
    %62 = tpu.matmul %61, %49, %cst_25 {dimension_numbers = #tpu.dot_dimension_numbers<[2], [1], [1], [2], [0, 0, 0, 1, 1, 2], [0], [0]>} : vector<2x8x8xf32>, vector<2x8x8xf32>, vector<2x8x8xf32> -> vector<2x8x8xf32>
    "tpu.trace_stop"() : () -> ()
    %63 = vector.shape_cast %62 : vector<2x8x8xf32> to vector<16x8xf32>
    %64 = vector.extract_strided_slice %41 {offsets = [0, 8], sizes = [16, 8], strides = [1, 1]} : vector<16x32xf32> to vector<16x8xf32>
    %65 = vector.shape_cast %64 : vector<16x8xf32> to vector<2x8x8xf32>
    %66 = vector.extract_strided_slice %42 {offsets = [0, 8], sizes = [16, 8], strides = [1, 1]} : vector<16x32xf32> to vector<16x8xf32>
    %67 = vector.shape_cast %66 : vector<16x8xf32> to vector<2x8x8xf32>
    %68 = vector.extract_strided_slice %43 {offsets = [0, 8], sizes = [16, 8], strides = [1, 1]} : vector<16x32xf32> to vector<16x8xf32>
    %69 = vector.shape_cast %68 : vector<16x8xf32> to vector<2x8x8xf32>
    "tpu.trace_start"() <{level = 10 : i32, message = "bqd,bkd->bqk"}> : () -> ()
    %cst_26 = arith.constant dense<0.000000e+00> : vector<2x8x8xf32>
    %70 = tpu.matmul %65, %67, %cst_26 {dimension_numbers = #tpu.dot_dimension_numbers<[2], [2], [1], [1], [0, 0, 0, 1, 1, 1], [0], [0]>} : vector<2x8x8xf32>, vector<2x8x8xf32>, vector<2x8x8xf32> -> vector<2x8x8xf32>
    "tpu.trace_stop"() : () -> ()
    %71 = vector.broadcast %15 : vector<2x1x8xf32> to vector<2x8x8xf32>
    %72 = arith.addf %70, %71 : vector<2x8x8xf32>
    %cst_27 = arith.constant dense<0xFF800000> : vector<2x8xf32>
    %73 = vector.multi_reduction <maximumf>, %72, %cst_27 [2] : vector<2x8x8xf32> to vector<2x8xf32>
    %74 = vector.shape_cast %73 : vector<2x8xf32> to vector<2x8x1xf32>
    %75 = vector.broadcast %74 : vector<2x8x1xf32> to vector<2x8x8xf32>
    %76 = arith.subf %72, %75 : vector<2x8x8xf32>
    %77 = math.exp %76 : vector<2x8x8xf32>
    %cst_28 = arith.constant dense<0.000000e+00> : vector<2x8xf32>
    %78 = vector.multi_reduction <add>, %77, %cst_28 [2] : vector<2x8x8xf32> to vector<2x8xf32>
    %79 = vector.shape_cast %78 : vector<2x8xf32> to vector<2x8x1xf32>
    %80 = vector.broadcast %79 : vector<2x8x1xf32> to vector<2x8x8xf32>
    %81 = arith.divf %77, %80 : vector<2x8x8xf32>
    "tpu.trace_start"() <{level = 10 : i32, message = "bqk,bkd->bqd"}> : () -> ()
    %cst_29 = arith.constant dense<0.000000e+00> : vector<2x8x8xf32>
    %82 = tpu.matmul %81, %69, %cst_29 {dimension_numbers = #tpu.dot_dimension_numbers<[2], [1], [1], [2], [0, 0, 0, 1, 1, 2], [0], [0]>} : vector<2x8x8xf32>, vector<2x8x8xf32>, vector<2x8x8xf32> -> vector<2x8x8xf32>
    "tpu.trace_stop"() : () -> ()
    %83 = vector.shape_cast %82 : vector<2x8x8xf32> to vector<16x8xf32>
    %84 = vector.extract_strided_slice %41 {offsets = [0, 16], sizes = [16, 8], strides = [1, 1]} : vector<16x32xf32> to vector<16x8xf32>
    %85 = vector.shape_cast %84 : vector<16x8xf32> to vector<2x8x8xf32>
    %86 = vector.extract_strided_slice %42 {offsets = [0, 16], sizes = [16, 8], strides = [1, 1]} : vector<16x32xf32> to vector<16x8xf32>
    %87 = vector.shape_cast %86 : vector<16x8xf32> to vector<2x8x8xf32>
    %88 = vector.extract_strided_slice %43 {offsets = [0, 16], sizes = [16, 8], strides = [1, 1]} : vector<16x32xf32> to vector<16x8xf32>
    %89 = vector.shape_cast %88 : vector<16x8xf32> to vector<2x8x8xf32>
    "tpu.trace_start"() <{level = 10 : i32, message = "bqd,bkd->bqk"}> : () -> ()
    %cst_30 = arith.constant dense<0.000000e+00> : vector<2x8x8xf32>
    %90 = tpu.matmul %85, %87, %cst_30 {dimension_numbers = #tpu.dot_dimension_numbers<[2], [2], [1], [1], [0, 0, 0, 1, 1, 1], [0], [0]>} : vector<2x8x8xf32>, vector<2x8x8xf32>, vector<2x8x8xf32> -> vector<2x8x8xf32>
    "tpu.trace_stop"() : () -> ()
    %91 = vector.broadcast %15 : vector<2x1x8xf32> to vector<2x8x8xf32>
    %92 = arith.addf %90, %91 : vector<2x8x8xf32>
    %cst_31 = arith.constant dense<0xFF800000> : vector<2x8xf32>
    %93 = vector.multi_reduction <maximumf>, %92, %cst_31 [2] : vector<2x8x8xf32> to vector<2x8xf32>
    %94 = vector.shape_cast %93 : vector<2x8xf32> to vector<2x8x1xf32>
    %95 = vector.broadcast %94 : vector<2x8x1xf32> to vector<2x8x8xf32>
    %96 = arith.subf %92, %95 : vector<2x8x8xf32>
    %97 = math.exp %96 : vector<2x8x8xf32>
    %cst_32 = arith.constant dense<0.000000e+00> : vector<2x8xf32>
    %98 = vector.multi_reduction <add>, %97, %cst_32 [2] : vector<2x8x8xf32> to vector<2x8xf32>
    %99 = vector.shape_cast %98 : vector<2x8xf32> to vector<2x8x1xf32>
    %100 = vector.broadcast %99 : vector<2x8x1xf32> to vector<2x8x8xf32>
    %101 = arith.divf %97, %100 : vector<2x8x8xf32>
    "tpu.trace_start"() <{level = 10 : i32, message = "bqk,bkd->bqd"}> : () -> ()
    %cst_33 = arith.constant dense<0.000000e+00> : vector<2x8x8xf32>
    %102 = tpu.matmul %101, %89, %cst_33 {dimension_numbers = #tpu.dot_dimension_numbers<[2], [1], [1], [2], [0, 0, 0, 1, 1, 2], [0], [0]>} : vector<2x8x8xf32>, vector<2x8x8xf32>, vector<2x8x8xf32> -> vector<2x8x8xf32>
    "tpu.trace_stop"() : () -> ()
    %103 = vector.shape_cast %102 : vector<2x8x8xf32> to vector<16x8xf32>
    %104 = vector.extract_strided_slice %41 {offsets = [0, 24], sizes = [16, 8], strides = [1, 1]} : vector<16x32xf32> to vector<16x8xf32>
    %105 = vector.shape_cast %104 : vector<16x8xf32> to vector<2x8x8xf32>
    %106 = vector.extract_strided_slice %42 {offsets = [0, 24], sizes = [16, 8], strides = [1, 1]} : vector<16x32xf32> to vector<16x8xf32>
    %107 = vector.shape_cast %106 : vector<16x8xf32> to vector<2x8x8xf32>
    %108 = vector.extract_strided_slice %43 {offsets = [0, 24], sizes = [16, 8], strides = [1, 1]} : vector<16x32xf32> to vector<16x8xf32>
    %109 = vector.shape_cast %108 : vector<16x8xf32> to vector<2x8x8xf32>
    "tpu.trace_start"() <{level = 10 : i32, message = "bqd,bkd->bqk"}> : () -> ()
    %cst_34 = arith.constant dense<0.000000e+00> : vector<2x8x8xf32>
    %110 = tpu.matmul %105, %107, %cst_34 {dimension_numbers = #tpu.dot_dimension_numbers<[2], [2], [1], [1], [0, 0, 0, 1, 1, 1], [0], [0]>} : vector<2x8x8xf32>, vector<2x8x8xf32>, vector<2x8x8xf32> -> vector<2x8x8xf32>
    "tpu.trace_stop"() : () -> ()
    %111 = vector.broadcast %15 : vector<2x1x8xf32> to vector<2x8x8xf32>
    %112 = arith.addf %110, %111 : vector<2x8x8xf32>
    %cst_35 = arith.constant dense<0xFF800000> : vector<2x8xf32>
    %113 = vector.multi_reduction <maximumf>, %112, %cst_35 [2] : vector<2x8x8xf32> to vector<2x8xf32>
    %114 = vector.shape_cast %113 : vector<2x8xf32> to vector<2x8x1xf32>
    %115 = vector.broadcast %114 : vector<2x8x1xf32> to vector<2x8x8xf32>
    %116 = arith.subf %112, %115 : vector<2x8x8xf32>
    %117 = math.exp %116 : vector<2x8x8xf32>
    %cst_36 = arith.constant dense<0.000000e+00> : vector<2x8xf32>
    %118 = vector.multi_reduction <add>, %117, %cst_36 [2] : vector<2x8x8xf32> to vector<2x8xf32>
    %119 = vector.shape_cast %118 : vector<2x8xf32> to vector<2x8x1xf32>
    %120 = vector.broadcast %119 : vector<2x8x1xf32> to vector<2x8x8xf32>
    %121 = arith.divf %117, %120 : vector<2x8x8xf32>
    "tpu.trace_start"() <{level = 10 : i32, message = "bqk,bkd->bqd"}> : () -> ()
    %cst_37 = arith.constant dense<0.000000e+00> : vector<2x8x8xf32>
    %122 = tpu.matmul %121, %109, %cst_37 {dimension_numbers = #tpu.dot_dimension_numbers<[2], [1], [1], [2], [0, 0, 0, 1, 1, 2], [0], [0]>} : vector<2x8x8xf32>, vector<2x8x8xf32>, vector<2x8x8xf32> -> vector<2x8x8xf32>
    "tpu.trace_stop"() : () -> ()
    %123 = vector.shape_cast %122 : vector<2x8x8xf32> to vector<16x8xf32>
    %124 = tpu.concatenate %63, %83, %103, %123 in 1 : vector<16x8xf32>, vector<16x8xf32>, vector<16x8xf32>, vector<16x8xf32> -> vector<16x32xf32>
    %c0_38 = arith.constant 0 : index
    %c0_39 = arith.constant 0 : index
    %c0_40 = arith.constant 0 : index
    %125 = vector.load %arg5[%c0_38, %c0_39, %c0_40] : memref<2x32x32xf32, #tpu.memory_space<vmem>>, vector<1x32x32xf32>
    %126 = vector.shape_cast %125 : vector<1x32x32xf32> to vector<32x32xf32>
    %cst_41 = arith.constant dense<0.000000e+00> : vector<16x32xf32>
    %127 = tpu.matmul %124, %126, %cst_41 {dimension_numbers = #tpu.dot_dimension_numbers<[1], [0], [0], [1], [0, 0, 1, 1], [], []>} : vector<16x32xf32>, vector<32x32xf32>, vector<16x32xf32> -> vector<16x32xf32>
    %128 = arith.addf %9, %127 : vector<16x32xf32>
    %c0_42 = arith.constant 0 : index
    %c0_43 = arith.constant 0 : index
    %c0_44 = arith.constant 0 : index
    %129 = vector.load %arg9[%c0_42, %c0_43, %c0_44] : memref<2x1x32xf32, #tpu.memory_space<vmem>>, vector<1x1x32xf32>
    %130 = vector.shape_cast %129 : vector<1x1x32xf32> to vector<1x32xf32>
    %131 = vector.broadcast %130 : vector<1x32xf32> to vector<16x32xf32>
    %132 = arith.addf %128, %131 : vector<16x32xf32>
    %cst_45 = arith.constant dense<0.000000e+00> : vector<16xf32>
    %133 = vector.multi_reduction <add>, %132, %cst_45 [1] : vector<16x32xf32> to vector<16xf32>
    %134 = vector.shape_cast %133 : vector<16xf32> to vector<16x1xf32>
    %cst_46 = arith.constant 3.200000e+01 : f32
    %135 = vector.broadcast %cst_46 : f32 to vector<16x1xf32>
    %136 = arith.divf %134, %135 : vector<16x1xf32>
    %137 = vector.broadcast %136 : vector<16x1xf32> to vector<16x32xf32>
    %138 = arith.subf %132, %137 : vector<16x32xf32>
    %139 = arith.mulf %138, %138 : vector<16x32xf32>
    %cst_47 = arith.constant dense<0.000000e+00> : vector<16xf32>
    %140 = vector.multi_reduction <add>, %139, %cst_47 [1] : vector<16x32xf32> to vector<16xf32>
    %141 = vector.shape_cast %140 : vector<16xf32> to vector<16x1xf32>
    %cst_48 = arith.constant 3.200000e+01 : f32
    %142 = vector.broadcast %cst_48 : f32 to vector<16x1xf32>
    %143 = arith.divf %141, %142 : vector<16x1xf32>
    %144 = vector.broadcast %136 : vector<16x1xf32> to vector<16x32xf32>
    %145 = arith.subf %132, %144 : vector<16x32xf32>
    %cst_49 = arith.constant 9.99999974E-6 : f32
    %146 = vector.broadcast %cst_49 : f32 to vector<16x1xf32>
    %147 = arith.addf %143, %146 : vector<16x1xf32>
    %148 = math.rsqrt %147 : vector<16x1xf32>
    %149 = vector.broadcast %148 : vector<16x1xf32> to vector<16x32xf32>
    %150 = arith.mulf %145, %149 : vector<16x32xf32>
    %c0_50 = arith.constant 0 : index
    %c0_51 = arith.constant 0 : index
    %c0_52 = arith.constant 0 : index
    %151 = vector.load %arg6[%c0_50, %c0_51, %c0_52] : memref<2x32x64xf32, #tpu.memory_space<vmem>>, vector<1x32x64xf32>
    %152 = vector.shape_cast %151 : vector<1x32x64xf32> to vector<32x64xf32>
    %cst_53 = arith.constant dense<0.000000e+00> : vector<16x64xf32>
    %153 = tpu.matmul %150, %152, %cst_53 {dimension_numbers = #tpu.dot_dimension_numbers<[1], [0], [0], [1], [0, 0, 1, 1], [], []>} : vector<16x32xf32>, vector<32x64xf32>, vector<16x64xf32> -> vector<16x64xf32>
    %c0_54 = arith.constant 0 : index
    %c0_55 = arith.constant 0 : index
    %c0_56 = arith.constant 0 : index
    %154 = vector.load %arg10[%c0_54, %c0_55, %c0_56] : memref<2x1x64xf32, #tpu.memory_space<vmem>>, vector<1x1x64xf32>
    %155 = vector.shape_cast %154 : vector<1x1x64xf32> to vector<1x64xf32>
    %156 = vector.broadcast %155 : vector<1x64xf32> to vector<16x64xf32>
    %157 = arith.addf %153, %156 : vector<16x64xf32>
    %cst_57 = arith.constant 0.000000e+00 : f32
    %158 = vector.broadcast %cst_57 : f32 to vector<16x64xf32>
    %159 = arith.maximumf %157, %158 : vector<16x64xf32>
    %c0_58 = arith.constant 0 : index
    %c0_59 = arith.constant 0 : index
    %c0_60 = arith.constant 0 : index
    %160 = vector.load %arg7[%c0_58, %c0_59, %c0_60] : memref<2x64x32xf32, #tpu.memory_space<vmem>>, vector<1x64x32xf32>
    %161 = vector.shape_cast %160 : vector<1x64x32xf32> to vector<64x32xf32>
    %cst_61 = arith.constant dense<0.000000e+00> : vector<16x32xf32>
    %162 = tpu.matmul %159, %161, %cst_61 {dimension_numbers = #tpu.dot_dimension_numbers<[1], [0], [0], [1], [0, 0, 1, 1], [], []>} : vector<16x64xf32>, vector<64x32xf32>, vector<16x32xf32> -> vector<16x32xf32>
    %163 = arith.addf %132, %162 : vector<16x32xf32>
    %c0_62 = arith.constant 0 : index
    %c0_63 = arith.constant 0 : index
    %c0_64 = arith.constant 0 : index
    %164 = vector.load %arg11[%c0_62, %c0_63, %c0_64] : memref<2x1x32xf32, #tpu.memory_space<vmem>>, vector<1x1x32xf32>
    %165 = vector.shape_cast %164 : vector<1x1x32xf32> to vector<1x32xf32>
    %166 = vector.broadcast %165 : vector<1x32xf32> to vector<16x32xf32>
    %167 = arith.addf %163, %166 : vector<16x32xf32>
    %cst_65 = arith.constant dense<0.000000e+00> : vector<16xf32>
    %168 = vector.multi_reduction <add>, %167, %cst_65 [1] : vector<16x32xf32> to vector<16xf32>
    %169 = vector.shape_cast %168 : vector<16xf32> to vector<16x1xf32>
    %cst_66 = arith.constant 3.200000e+01 : f32
    %170 = vector.broadcast %cst_66 : f32 to vector<16x1xf32>
    %171 = arith.divf %169, %170 : vector<16x1xf32>
    %172 = vector.broadcast %171 : vector<16x1xf32> to vector<16x32xf32>
    %173 = arith.subf %167, %172 : vector<16x32xf32>
    %174 = arith.mulf %173, %173 : vector<16x32xf32>
    %cst_67 = arith.constant dense<0.000000e+00> : vector<16xf32>
    %175 = vector.multi_reduction <add>, %174, %cst_67 [1] : vector<16x32xf32> to vector<16xf32>
    %176 = vector.shape_cast %175 : vector<16xf32> to vector<16x1xf32>
    %cst_68 = arith.constant 3.200000e+01 : f32
    %177 = vector.broadcast %cst_68 : f32 to vector<16x1xf32>
    %178 = arith.divf %176, %177 : vector<16x1xf32>
    %179 = vector.broadcast %171 : vector<16x1xf32> to vector<16x32xf32>
    %180 = arith.subf %167, %179 : vector<16x32xf32>
    %cst_69 = arith.constant 9.99999974E-6 : f32
    %181 = vector.broadcast %cst_69 : f32 to vector<16x1xf32>
    %182 = arith.addf %178, %181 : vector<16x1xf32>
    %183 = math.rsqrt %182 : vector<16x1xf32>
    %184 = vector.broadcast %183 : vector<16x1xf32> to vector<16x32xf32>
    %185 = arith.mulf %180, %184 : vector<16x32xf32>
    %c1 = arith.constant 1 : index
    %c0_70 = arith.constant 0 : index
    %c0_71 = arith.constant 0 : index
    %186 = vector.load %arg4[%c1, %c0_70, %c0_71] : memref<2x32x96xf32, #tpu.memory_space<vmem>>, vector<1x32x96xf32>
    %187 = vector.shape_cast %186 : vector<1x32x96xf32> to vector<32x96xf32>
    %cst_72 = arith.constant dense<0.000000e+00> : vector<16x96xf32>
    %188 = tpu.matmul %185, %187, %cst_72 {dimension_numbers = #tpu.dot_dimension_numbers<[1], [0], [0], [1], [0, 0, 1, 1], [], []>} : vector<16x32xf32>, vector<32x96xf32>, vector<16x96xf32> -> vector<16x96xf32>
    %c1_73 = arith.constant 1 : index
    %c0_74 = arith.constant 0 : index
    %c0_75 = arith.constant 0 : index
    %189 = vector.load %arg8[%c1_73, %c0_74, %c0_75] : memref<2x1x96xf32, #tpu.memory_space<vmem>>, vector<1x1x96xf32>
    %190 = vector.shape_cast %189 : vector<1x1x96xf32> to vector<1x96xf32>
    %191 = vector.broadcast %190 : vector<1x96xf32> to vector<16x96xf32>
    %192 = arith.addf %188, %191 : vector<16x96xf32>
    %193 = vector.extract_strided_slice %192 {offsets = [0, 0], sizes = [16, 32], strides = [1, 1]} : vector<16x96xf32> to vector<16x32xf32>
    %194 = vector.extract_strided_slice %192 {offsets = [0, 32], sizes = [16, 32], strides = [1, 1]} : vector<16x96xf32> to vector<16x32xf32>
    %195 = vector.extract_strided_slice %192 {offsets = [0, 64], sizes = [16, 32], strides = [1, 1]} : vector<16x96xf32> to vector<16x32xf32>
    %196 = vector.extract_strided_slice %193 {offsets = [0, 0], sizes = [16, 8], strides = [1, 1]} : vector<16x32xf32> to vector<16x8xf32>
    %197 = vector.shape_cast %196 : vector<16x8xf32> to vector<2x8x8xf32>
    %198 = vector.extract_strided_slice %194 {offsets = [0, 0], sizes = [16, 8], strides = [1, 1]} : vector<16x32xf32> to vector<16x8xf32>
    %199 = vector.shape_cast %198 : vector<16x8xf32> to vector<2x8x8xf32>
    %200 = vector.extract_strided_slice %195 {offsets = [0, 0], sizes = [16, 8], strides = [1, 1]} : vector<16x32xf32> to vector<16x8xf32>
    %201 = vector.shape_cast %200 : vector<16x8xf32> to vector<2x8x8xf32>
    "tpu.trace_start"() <{level = 10 : i32, message = "bqd,bkd->bqk"}> : () -> ()
    %cst_76 = arith.constant dense<0.000000e+00> : vector<2x8x8xf32>
    %202 = tpu.matmul %197, %199, %cst_76 {dimension_numbers = #tpu.dot_dimension_numbers<[2], [2], [1], [1], [0, 0, 0, 1, 1, 1], [0], [0]>} : vector<2x8x8xf32>, vector<2x8x8xf32>, vector<2x8x8xf32> -> vector<2x8x8xf32>
    "tpu.trace_stop"() : () -> ()
    %203 = vector.broadcast %15 : vector<2x1x8xf32> to vector<2x8x8xf32>
    %204 = arith.addf %202, %203 : vector<2x8x8xf32>
    %cst_77 = arith.constant dense<0xFF800000> : vector<2x8xf32>
    %205 = vector.multi_reduction <maximumf>, %204, %cst_77 [2] : vector<2x8x8xf32> to vector<2x8xf32>
    %206 = vector.shape_cast %205 : vector<2x8xf32> to vector<2x8x1xf32>
    %207 = vector.broadcast %206 : vector<2x8x1xf32> to vector<2x8x8xf32>
    %208 = arith.subf %204, %207 : vector<2x8x8xf32>
    %209 = math.exp %208 : vector<2x8x8xf32>
    %cst_78 = arith.constant dense<0.000000e+00> : vector<2x8xf32>
    %210 = vector.multi_reduction <add>, %209, %cst_78 [2] : vector<2x8x8xf32> to vector<2x8xf32>
    %211 = vector.shape_cast %210 : vector<2x8xf32> to vector<2x8x1xf32>
    %212 = vector.broadcast %211 : vector<2x8x1xf32> to vector<2x8x8xf32>
    %213 = arith.divf %209, %212 : vector<2x8x8xf32>
    "tpu.trace_start"() <{level = 10 : i32, message = "bqk,bkd->bqd"}> : () -> ()
    %cst_79 = arith.constant dense<0.000000e+00> : vector<2x8x8xf32>
    %214 = tpu.matmul %213, %201, %cst_79 {dimension_numbers = #tpu.dot_dimension_numbers<[2], [1], [1], [2], [0, 0, 0, 1, 1, 2], [0], [0]>} : vector<2x8x8xf32>, vector<2x8x8xf32>, vector<2x8x8xf32> -> vector<2x8x8xf32>
    "tpu.trace_stop"() : () -> ()
    %215 = vector.shape_cast %214 : vector<2x8x8xf32> to vector<16x8xf32>
    %216 = vector.extract_strided_slice %193 {offsets = [0, 8], sizes = [16, 8], strides = [1, 1]} : vector<16x32xf32> to vector<16x8xf32>
    %217 = vector.shape_cast %216 : vector<16x8xf32> to vector<2x8x8xf32>
    %218 = vector.extract_strided_slice %194 {offsets = [0, 8], sizes = [16, 8], strides = [1, 1]} : vector<16x32xf32> to vector<16x8xf32>
    %219 = vector.shape_cast %218 : vector<16x8xf32> to vector<2x8x8xf32>
    %220 = vector.extract_strided_slice %195 {offsets = [0, 8], sizes = [16, 8], strides = [1, 1]} : vector<16x32xf32> to vector<16x8xf32>
    %221 = vector.shape_cast %220 : vector<16x8xf32> to vector<2x8x8xf32>
    "tpu.trace_start"() <{level = 10 : i32, message = "bqd,bkd->bqk"}> : () -> ()
    %cst_80 = arith.constant dense<0.000000e+00> : vector<2x8x8xf32>
    %222 = tpu.matmul %217, %219, %cst_80 {dimension_numbers = #tpu.dot_dimension_numbers<[2], [2], [1], [1], [0, 0, 0, 1, 1, 1], [0], [0]>} : vector<2x8x8xf32>, vector<2x8x8xf32>, vector<2x8x8xf32> -> vector<2x8x8xf32>
    "tpu.trace_stop"() : () -> ()
    %223 = vector.broadcast %15 : vector<2x1x8xf32> to vector<2x8x8xf32>
    %224 = arith.addf %222, %223 : vector<2x8x8xf32>
    %cst_81 = arith.constant dense<0xFF800000> : vector<2x8xf32>
    %225 = vector.multi_reduction <maximumf>, %224, %cst_81 [2] : vector<2x8x8xf32> to vector<2x8xf32>
    %226 = vector.shape_cast %225 : vector<2x8xf32> to vector<2x8x1xf32>
    %227 = vector.broadcast %226 : vector<2x8x1xf32> to vector<2x8x8xf32>
    %228 = arith.subf %224, %227 : vector<2x8x8xf32>
    %229 = math.exp %228 : vector<2x8x8xf32>
    %cst_82 = arith.constant dense<0.000000e+00> : vector<2x8xf32>
    %230 = vector.multi_reduction <add>, %229, %cst_82 [2] : vector<2x8x8xf32> to vector<2x8xf32>
    %231 = vector.shape_cast %230 : vector<2x8xf32> to vector<2x8x1xf32>
    %232 = vector.broadcast %231 : vector<2x8x1xf32> to vector<2x8x8xf32>
    %233 = arith.divf %229, %232 : vector<2x8x8xf32>
    "tpu.trace_start"() <{level = 10 : i32, message = "bqk,bkd->bqd"}> : () -> ()
    %cst_83 = arith.constant dense<0.000000e+00> : vector<2x8x8xf32>
    %234 = tpu.matmul %233, %221, %cst_83 {dimension_numbers = #tpu.dot_dimension_numbers<[2], [1], [1], [2], [0, 0, 0, 1, 1, 2], [0], [0]>} : vector<2x8x8xf32>, vector<2x8x8xf32>, vector<2x8x8xf32> -> vector<2x8x8xf32>
    "tpu.trace_stop"() : () -> ()
    %235 = vector.shape_cast %234 : vector<2x8x8xf32> to vector<16x8xf32>
    %236 = vector.extract_strided_slice %193 {offsets = [0, 16], sizes = [16, 8], strides = [1, 1]} : vector<16x32xf32> to vector<16x8xf32>
    %237 = vector.shape_cast %236 : vector<16x8xf32> to vector<2x8x8xf32>
    %238 = vector.extract_strided_slice %194 {offsets = [0, 16], sizes = [16, 8], strides = [1, 1]} : vector<16x32xf32> to vector<16x8xf32>
    %239 = vector.shape_cast %238 : vector<16x8xf32> to vector<2x8x8xf32>
    %240 = vector.extract_strided_slice %195 {offsets = [0, 16], sizes = [16, 8], strides = [1, 1]} : vector<16x32xf32> to vector<16x8xf32>
    %241 = vector.shape_cast %240 : vector<16x8xf32> to vector<2x8x8xf32>
    "tpu.trace_start"() <{level = 10 : i32, message = "bqd,bkd->bqk"}> : () -> ()
    %cst_84 = arith.constant dense<0.000000e+00> : vector<2x8x8xf32>
    %242 = tpu.matmul %237, %239, %cst_84 {dimension_numbers = #tpu.dot_dimension_numbers<[2], [2], [1], [1], [0, 0, 0, 1, 1, 1], [0], [0]>} : vector<2x8x8xf32>, vector<2x8x8xf32>, vector<2x8x8xf32> -> vector<2x8x8xf32>
    "tpu.trace_stop"() : () -> ()
    %243 = vector.broadcast %15 : vector<2x1x8xf32> to vector<2x8x8xf32>
    %244 = arith.addf %242, %243 : vector<2x8x8xf32>
    %cst_85 = arith.constant dense<0xFF800000> : vector<2x8xf32>
    %245 = vector.multi_reduction <maximumf>, %244, %cst_85 [2] : vector<2x8x8xf32> to vector<2x8xf32>
    %246 = vector.shape_cast %245 : vector<2x8xf32> to vector<2x8x1xf32>
    %247 = vector.broadcast %246 : vector<2x8x1xf32> to vector<2x8x8xf32>
    %248 = arith.subf %244, %247 : vector<2x8x8xf32>
    %249 = math.exp %248 : vector<2x8x8xf32>
    %cst_86 = arith.constant dense<0.000000e+00> : vector<2x8xf32>
    %250 = vector.multi_reduction <add>, %249, %cst_86 [2] : vector<2x8x8xf32> to vector<2x8xf32>
    %251 = vector.shape_cast %250 : vector<2x8xf32> to vector<2x8x1xf32>
    %252 = vector.broadcast %251 : vector<2x8x1xf32> to vector<2x8x8xf32>
    %253 = arith.divf %249, %252 : vector<2x8x8xf32>
    "tpu.trace_start"() <{level = 10 : i32, message = "bqk,bkd->bqd"}> : () -> ()
    %cst_87 = arith.constant dense<0.000000e+00> : vector<2x8x8xf32>
    %254 = tpu.matmul %253, %241, %cst_87 {dimension_numbers = #tpu.dot_dimension_numbers<[2], [1], [1], [2], [0, 0, 0, 1, 1, 2], [0], [0]>} : vector<2x8x8xf32>, vector<2x8x8xf32>, vector<2x8x8xf32> -> vector<2x8x8xf32>
    "tpu.trace_stop"() : () -> ()
    %255 = vector.shape_cast %254 : vector<2x8x8xf32> to vector<16x8xf32>
    %256 = vector.extract_strided_slice %193 {offsets = [0, 24], sizes = [16, 8], strides = [1, 1]} : vector<16x32xf32> to vector<16x8xf32>
    %257 = vector.shape_cast %256 : vector<16x8xf32> to vector<2x8x8xf32>
    %258 = vector.extract_strided_slice %194 {offsets = [0, 24], sizes = [16, 8], strides = [1, 1]} : vector<16x32xf32> to vector<16x8xf32>
    %259 = vector.shape_cast %258 : vector<16x8xf32> to vector<2x8x8xf32>
    %260 = vector.extract_strided_slice %195 {offsets = [0, 24], sizes = [16, 8], strides = [1, 1]} : vector<16x32xf32> to vector<16x8xf32>
    %261 = vector.shape_cast %260 : vector<16x8xf32> to vector<2x8x8xf32>
    "tpu.trace_start"() <{level = 10 : i32, message = "bqd,bkd->bqk"}> : () -> ()
    %cst_88 = arith.constant dense<0.000000e+00> : vector<2x8x8xf32>
    %262 = tpu.matmul %257, %259, %cst_88 {dimension_numbers = #tpu.dot_dimension_numbers<[2], [2], [1], [1], [0, 0, 0, 1, 1, 1], [0], [0]>} : vector<2x8x8xf32>, vector<2x8x8xf32>, vector<2x8x8xf32> -> vector<2x8x8xf32>
    "tpu.trace_stop"() : () -> ()
    %263 = vector.broadcast %15 : vector<2x1x8xf32> to vector<2x8x8xf32>
    %264 = arith.addf %262, %263 : vector<2x8x8xf32>
    %cst_89 = arith.constant dense<0xFF800000> : vector<2x8xf32>
    %265 = vector.multi_reduction <maximumf>, %264, %cst_89 [2] : vector<2x8x8xf32> to vector<2x8xf32>
    %266 = vector.shape_cast %265 : vector<2x8xf32> to vector<2x8x1xf32>
    %267 = vector.broadcast %266 : vector<2x8x1xf32> to vector<2x8x8xf32>
    %268 = arith.subf %264, %267 : vector<2x8x8xf32>
    %269 = math.exp %268 : vector<2x8x8xf32>
    %cst_90 = arith.constant dense<0.000000e+00> : vector<2x8xf32>
    %270 = vector.multi_reduction <add>, %269, %cst_90 [2] : vector<2x8x8xf32> to vector<2x8xf32>
    %271 = vector.shape_cast %270 : vector<2x8xf32> to vector<2x8x1xf32>
    %272 = vector.broadcast %271 : vector<2x8x1xf32> to vector<2x8x8xf32>
    %273 = arith.divf %269, %272 : vector<2x8x8xf32>
    "tpu.trace_start"() <{level = 10 : i32, message = "bqk,bkd->bqd"}> : () -> ()
    %cst_91 = arith.constant dense<0.000000e+00> : vector<2x8x8xf32>
    %274 = tpu.matmul %273, %261, %cst_91 {dimension_numbers = #tpu.dot_dimension_numbers<[2], [1], [1], [2], [0, 0, 0, 1, 1, 2], [0], [0]>} : vector<2x8x8xf32>, vector<2x8x8xf32>, vector<2x8x8xf32> -> vector<2x8x8xf32>
    "tpu.trace_stop"() : () -> ()
    %275 = vector.shape_cast %274 : vector<2x8x8xf32> to vector<16x8xf32>
    %276 = tpu.concatenate %215, %235, %255, %275 in 1 : vector<16x8xf32>, vector<16x8xf32>, vector<16x8xf32>, vector<16x8xf32> -> vector<16x32xf32>
    %c1_92 = arith.constant 1 : index
    %c0_93 = arith.constant 0 : index
    %c0_94 = arith.constant 0 : index
    %277 = vector.load %arg5[%c1_92, %c0_93, %c0_94] : memref<2x32x32xf32, #tpu.memory_space<vmem>>, vector<1x32x32xf32>
    %278 = vector.shape_cast %277 : vector<1x32x32xf32> to vector<32x32xf32>
    %cst_95 = arith.constant dense<0.000000e+00> : vector<16x32xf32>
    %279 = tpu.matmul %276, %278, %cst_95 {dimension_numbers = #tpu.dot_dimension_numbers<[1], [0], [0], [1], [0, 0, 1, 1], [], []>} : vector<16x32xf32>, vector<32x32xf32>, vector<16x32xf32> -> vector<16x32xf32>
    %280 = arith.addf %167, %279 : vector<16x32xf32>
    %c1_96 = arith.constant 1 : index
    %c0_97 = arith.constant 0 : index
    %c0_98 = arith.constant 0 : index
    %281 = vector.load %arg9[%c1_96, %c0_97, %c0_98] : memref<2x1x32xf32, #tpu.memory_space<vmem>>, vector<1x1x32xf32>
    %282 = vector.shape_cast %281 : vector<1x1x32xf32> to vector<1x32xf32>
    %283 = vector.broadcast %282 : vector<1x32xf32> to vector<16x32xf32>
    %284 = arith.addf %280, %283 : vector<16x32xf32>
    %cst_99 = arith.constant dense<0.000000e+00> : vector<16xf32>
    %285 = vector.multi_reduction <add>, %284, %cst_99 [1] : vector<16x32xf32> to vector<16xf32>
    %286 = vector.shape_cast %285 : vector<16xf32> to vector<16x1xf32>
    %cst_100 = arith.constant 3.200000e+01 : f32
    %287 = vector.broadcast %cst_100 : f32 to vector<16x1xf32>
    %288 = arith.divf %286, %287 : vector<16x1xf32>
    %289 = vector.broadcast %288 : vector<16x1xf32> to vector<16x32xf32>
    %290 = arith.subf %284, %289 : vector<16x32xf32>
    %291 = arith.mulf %290, %290 : vector<16x32xf32>
    %cst_101 = arith.constant dense<0.000000e+00> : vector<16xf32>
    %292 = vector.multi_reduction <add>, %291, %cst_101 [1] : vector<16x32xf32> to vector<16xf32>
    %293 = vector.shape_cast %292 : vector<16xf32> to vector<16x1xf32>
    %cst_102 = arith.constant 3.200000e+01 : f32
    %294 = vector.broadcast %cst_102 : f32 to vector<16x1xf32>
    %295 = arith.divf %293, %294 : vector<16x1xf32>
    %296 = vector.broadcast %288 : vector<16x1xf32> to vector<16x32xf32>
    %297 = arith.subf %284, %296 : vector<16x32xf32>
    %cst_103 = arith.constant 9.99999974E-6 : f32
    %298 = vector.broadcast %cst_103 : f32 to vector<16x1xf32>
    %299 = arith.addf %295, %298 : vector<16x1xf32>
    %300 = math.rsqrt %299 : vector<16x1xf32>
    %301 = vector.broadcast %300 : vector<16x1xf32> to vector<16x32xf32>
    %302 = arith.mulf %297, %301 : vector<16x32xf32>
    %c1_104 = arith.constant 1 : index
    %c0_105 = arith.constant 0 : index
    %c0_106 = arith.constant 0 : index
    %303 = vector.load %arg6[%c1_104, %c0_105, %c0_106] : memref<2x32x64xf32, #tpu.memory_space<vmem>>, vector<1x32x64xf32>
    %304 = vector.shape_cast %303 : vector<1x32x64xf32> to vector<32x64xf32>
    %cst_107 = arith.constant dense<0.000000e+00> : vector<16x64xf32>
    %305 = tpu.matmul %302, %304, %cst_107 {dimension_numbers = #tpu.dot_dimension_numbers<[1], [0], [0], [1], [0, 0, 1, 1], [], []>} : vector<16x32xf32>, vector<32x64xf32>, vector<16x64xf32> -> vector<16x64xf32>
    %c1_108 = arith.constant 1 : index
    %c0_109 = arith.constant 0 : index
    %c0_110 = arith.constant 0 : index
    %306 = vector.load %arg10[%c1_108, %c0_109, %c0_110] : memref<2x1x64xf32, #tpu.memory_space<vmem>>, vector<1x1x64xf32>
    %307 = vector.shape_cast %306 : vector<1x1x64xf32> to vector<1x64xf32>
    %308 = vector.broadcast %307 : vector<1x64xf32> to vector<16x64xf32>
    %309 = arith.addf %305, %308 : vector<16x64xf32>
    %cst_111 = arith.constant 0.000000e+00 : f32
    %310 = vector.broadcast %cst_111 : f32 to vector<16x64xf32>
    %311 = arith.maximumf %309, %310 : vector<16x64xf32>
    %c1_112 = arith.constant 1 : index
    %c0_113 = arith.constant 0 : index
    %c0_114 = arith.constant 0 : index
    %312 = vector.load %arg7[%c1_112, %c0_113, %c0_114] : memref<2x64x32xf32, #tpu.memory_space<vmem>>, vector<1x64x32xf32>
    %313 = vector.shape_cast %312 : vector<1x64x32xf32> to vector<64x32xf32>
    %cst_115 = arith.constant dense<0.000000e+00> : vector<16x32xf32>
    %314 = tpu.matmul %311, %313, %cst_115 {dimension_numbers = #tpu.dot_dimension_numbers<[1], [0], [0], [1], [0, 0, 1, 1], [], []>} : vector<16x64xf32>, vector<64x32xf32>, vector<16x32xf32> -> vector<16x32xf32>
    %315 = arith.addf %284, %314 : vector<16x32xf32>
    %c1_116 = arith.constant 1 : index
    %c0_117 = arith.constant 0 : index
    %c0_118 = arith.constant 0 : index
    %316 = vector.load %arg11[%c1_116, %c0_117, %c0_118] : memref<2x1x32xf32, #tpu.memory_space<vmem>>, vector<1x1x32xf32>
    %317 = vector.shape_cast %316 : vector<1x1x32xf32> to vector<1x32xf32>
    %318 = vector.broadcast %317 : vector<1x32xf32> to vector<16x32xf32>
    %319 = arith.addf %315, %318 : vector<16x32xf32>
    %cst_119 = arith.constant dense<0.000000e+00> : vector<16xf32>
    %320 = vector.multi_reduction <add>, %319, %cst_119 [1] : vector<16x32xf32> to vector<16xf32>
    %321 = vector.shape_cast %320 : vector<16xf32> to vector<16x1xf32>
    %cst_120 = arith.constant 3.200000e+01 : f32
    %322 = vector.broadcast %cst_120 : f32 to vector<16x1xf32>
    %323 = arith.divf %321, %322 : vector<16x1xf32>
    %324 = vector.broadcast %323 : vector<16x1xf32> to vector<16x32xf32>
    %325 = arith.subf %319, %324 : vector<16x32xf32>
    %326 = arith.mulf %325, %325 : vector<16x32xf32>
    %cst_121 = arith.constant dense<0.000000e+00> : vector<16xf32>
    %327 = vector.multi_reduction <add>, %326, %cst_121 [1] : vector<16x32xf32> to vector<16xf32>
    %328 = vector.shape_cast %327 : vector<16xf32> to vector<16x1xf32>
    %cst_122 = arith.constant 3.200000e+01 : f32
    %329 = vector.broadcast %cst_122 : f32 to vector<16x1xf32>
    %330 = arith.divf %328, %329 : vector<16x1xf32>
    %331 = vector.broadcast %323 : vector<16x1xf32> to vector<16x32xf32>
    %332 = arith.subf %319, %331 : vector<16x32xf32>
    %cst_123 = arith.constant 9.99999974E-6 : f32
    %333 = vector.broadcast %cst_123 : f32 to vector<16x1xf32>
    %334 = arith.addf %330, %333 : vector<16x1xf32>
    %335 = math.rsqrt %334 : vector<16x1xf32>
    %336 = vector.broadcast %335 : vector<16x1xf32> to vector<16x32xf32>
    %337 = arith.mulf %332, %336 : vector<16x32xf32>
    %c0_124 = arith.constant 0 : index
    %c0_125 = arith.constant 0 : index
    %c0_126 = arith.constant 0 : index
    %338 = vector.load %arg12[%c0_124, %c0_125, %c0_126] : memref<2x1x32xf32, #tpu.memory_space<vmem>>, vector<1x1x32xf32>
    %339 = vector.shape_cast %338 : vector<1x1x32xf32> to vector<1x32xf32>
    %340 = vector.broadcast %339 : vector<1x32xf32> to vector<16x32xf32>
    %341 = arith.mulf %337, %340 : vector<16x32xf32>
    %c1_127 = arith.constant 1 : index
    %c0_128 = arith.constant 0 : index
    %c0_129 = arith.constant 0 : index
    %342 = vector.load %arg12[%c1_127, %c0_128, %c0_129] : memref<2x1x32xf32, #tpu.memory_space<vmem>>, vector<1x1x32xf32>
    %343 = vector.shape_cast %342 : vector<1x1x32xf32> to vector<1x32xf32>
    %344 = vector.broadcast %343 : vector<1x32xf32> to vector<16x32xf32>
    %345 = arith.addf %341, %344 : vector<16x32xf32>
    %c0_130 = arith.constant 0 : index
    %c0_131 = arith.constant 0 : index
    %346 = vector.load %arg13[%c0_130, %c0_131] : memref<16x32xf32, #tpu.memory_space<vmem>>, vector<16x32xf32>
    tpu.vector_store %arg13[%c0_130, %c0_131], %345 {strides = array<i32>} : memref<16x32xf32, #tpu.memory_space<vmem>>, vector<16x32xf32>,
    return
  }
}

</mosaic_0001>

<llo_original>
// kernel: run_encoder.1
$region0: #{run_encoder.1}
  #allocation0 [shape = 'u32[]', space=smem, size = 0x4, offset = 0x4, fixed_abs, tag = 'smem constant byte address 0x4 - core index']
  #allocation1 [shape = 'u32[72,128]{1,0:T(1,128)}', space=vmem, size = 0x9000, scoped, tag = 'internal scratch']
  %s0 = inlined_call_operand.vmem [shape: s32[16,1], index: 0, kind: input, shape index: {}]
  %s1 = inlined_call_operand.vmem [shape: s32[2,1,8], index: 1, kind: input, shape index: {}]
  %s2 = inlined_call_operand.vmem [shape: f32[50,32], index: 2, kind: input, shape index: {}]
  %s3 = inlined_call_operand.vmem [shape: f32[16,32], index: 3, kind: input, shape index: {}]
  %s4 = inlined_call_operand.vmem [shape: f32[2,32,96], index: 4, kind: input, shape index: {}]
  %s5 = inlined_call_operand.vmem [shape: f32[2,32,32], index: 5, kind: input, shape index: {}]
  %s6 = inlined_call_operand.vmem [shape: f32[2,32,64], index: 6, kind: input, shape index: {}]
  %s7 = inlined_call_operand.vmem [shape: f32[2,64,32], index: 7, kind: input, shape index: {}]
  %s8 = inlined_call_operand.vmem [shape: f32[2,1,96], index: 8, kind: input, shape index: {}]
  %s9 = inlined_call_operand.vmem [shape: f32[2,1,32], index: 9, kind: input, shape index: {}]
  %s10 = inlined_call_operand.vmem [shape: f32[2,1,64], index: 10, kind: input, shape index: {}]
  %s11 = inlined_call_operand.vmem [shape: f32[2,1,32], index: 11, kind: input, shape index: {}]
  %s12 = inlined_call_operand.vmem [shape: f32[2,1,32], index: 12, kind: input, shape index: {}]
  %s13 = inlined_call_operand.hbm [shape: f32[16,32], index: 13, kind: output, shape index: {}]
  %s14 = sld [smem:[#allocation0]]
  $region62: #{run_encoder.1} parent=0
    _
  %s16 = ssub.s32 1, %s14
  %s17 = scalar_select 0, %s16, %s14
  $region1: #{run_encoder.1} parent=0
    #allocation2 [shape = 'u8[8192]{0}', space=vmem, size = 0x2000, scoped, tag = 'output window, operand 0, single buffered']
    #allocation3 [shape = 's32[1]{0}', space=sflag, size = 0x4, scoped, tag = 'scoped memory for run_encoder.1']
    %18 = vsyncpa [#allocation3], 0
    // Predicated region
    $region2: #{run_encoder.1} parent=1 // pred_check
      _
    $region3: #{run_encoder.1} parent=1 // pred_check_branch
      %20 = sbr.rel (0) target = $region5
    $region4: #{run_encoder.1} parent=1 // pred_region
      _
    $region5: #{run_encoder.1} parent=1 // pred_fallthru
      _
    // Predicated region
    $region6: #{run_encoder.1} parent=1 // pred_check
      _
    $region7: #{run_encoder.1} parent=1 // pred_check_branch
      %22 = sbr.rel (0) target = $region9
    $region8: #{run_encoder.1} parent=1 // pred_region
      _
    $region9: #{run_encoder.1} parent=1 // pred_fallthru
      _
    // Predicated region
    $region10: #{run_encoder.1} parent=1 // pred_check
      _
    $region11: #{run_encoder.1} parent=1 // pred_check_branch
      %24 = sbr.rel (0) target = $region13
    $region12: #{run_encoder.1} parent=1 // pred_region
      _
    $region13: #{run_encoder.1} parent=1 // pred_fallthru
      _
    // Predicated region
    $region14: #{run_encoder.1} parent=1 // pred_check
      _
    $region15: #{run_encoder.1} parent=1 // pred_check_branch
      %26 = sbr.rel (0) target = $region17
    $region16: #{run_encoder.1} parent=1 // pred_region
      _
    $region17: #{run_encoder.1} parent=1 // pred_fallthru
      _
    // Predicated region
    $region18: #{run_encoder.1} parent=1 // pred_check
      _
    $region19: #{run_encoder.1} parent=1 // pred_check_branch
      %28 = sbr.rel (0) target = $region21
    $region20: #{run_encoder.1} parent=1 // pred_region
      _
    $region21: #{run_encoder.1} parent=1 // pred_fallthru
      _
    // Predicated region
    $region22: #{run_encoder.1} parent=1 // pred_check
      _
    $region23: #{run_encoder.1} parent=1 // pred_check_branch
      %30 = sbr.rel (0) target = $region25
    $region24: #{run_encoder.1} parent=1 // pred_region
      _
    $region25: #{run_encoder.1} parent=1 // pred_fallthru
      _
    // Predicated region
    $region26: #{run_encoder.1} parent=1 // pred_check
      _
    $region27: #{run_encoder.1} parent=1 // pred_check_branch
      %32 = sbr.rel (0) target = $region29
    $region28: #{run_encoder.1} parent=1 // pred_region
      _
    $region29: #{run_encoder.1} parent=1 // pred_fallthru
      _
    // Predicated region
    $region30: #{run_encoder.1} parent=1 // pred_check
      _
    $region31: #{run_encoder.1} parent=1 // pred_check_branch
      %34 = sbr.rel (0) target = $region33
    $region32: #{run_encoder.1} parent=1 // pred_region
      _
    $region33: #{run_encoder.1} parent=1 // pred_fallthru
      _
    // Predicated region
    $region34: #{run_encoder.1} parent=1 // pred_check
      _
    $region35: #{run_encoder.1} parent=1 // pred_check_branch
      %36 = sbr.rel (0) target = $region37
    $region36: #{run_encoder.1} parent=1 // pred_region
      _
    $region37: #{run_encoder.1} parent=1 // pred_fallthru
      _
    // Predicated region
    $region38: #{run_encoder.1} parent=1 // pred_check
      _
    $region39: #{run_encoder.1} parent=1 // pred_check_branch
      %38 = sbr.rel (0) target = $region41
    $region40: #{run_encoder.1} parent=1 // pred_region
      _
    $region41: #{run_encoder.1} parent=1 // pred_fallthru
      _
    // Predicated region
    $region42: #{run_encoder.1} parent=1 // pred_check
      _
    $region43: #{run_encoder.1} parent=1 // pred_check_branch
      %40 = sbr.rel (0) target = $region45
    $region44: #{run_encoder.1} parent=1 // pred_region
      _
    $region45: #{run_encoder.1} parent=1 // pred_fallthru
      _
    // Predicated region
    $region46: #{run_encoder.1} parent=1 // pred_check
      _
    $region47: #{run_encoder.1} parent=1 // pred_check_branch
      %42 = sbr.rel (0) target = $region49
    $region48: #{run_encoder.1} parent=1 // pred_region
      _
    $region49: #{run_encoder.1} parent=1 // pred_fallthru
      _
    // Predicated region
    $region50: #{run_encoder.1} parent=1 // pred_check
      _
    $region51: #{run_encoder.1} parent=1 // pred_check_branch
      %44 = sbr.rel (0) target = $region53
    $region52: #{run_encoder.1} parent=1 // pred_region
      _
    $region53: #{run_encoder.1} parent=1 // pred_fallthru
      _
    %v45 = vlaneseq
    %v46 = vand.u32 %v45, 127
    %v47 = vld [vmem:[%s0] sm:$0xff]
    %v48 = vld [vmem:[%s0 + $0x8] sm:$0xff]
    %49 = vset.pattern.permute.xlu0 0
    %50 = vperm.xlu0 %49, %v47
    %v51 = vpop.permute.xlu0 %50
    %52 = vset.pattern.permute.xlu0 0
    %53 = vperm.xlu0 %52, %v48
    %v54 = vpop.permute.xlu0 %53
    %vm55 = vcmp.eq.s32.totalorder %v46, %v51
    %vm56 = vcmp.eq.s32.totalorder %v46, %v54
    %v57 = vsel %vm55, 1, 0
    %v58 = vsel %vm56, 1, 0
    %v59 = vcvt.s32.f32 %v57
    %v60 = vcvt.s32.f32 %v58
    %v61 = vld [vmem:[%s2] sm:$0xff]
    %v62 = vld [vmem:[%s2 + $0x8] sm:$0xff]
    %v63 = vld [vmem:[%s2 + $0x10] sm:$0xff]
    %v64 = vld [vmem:[%s2 + $0x18] sm:$0xff]
    %v65 = vld [vmem:[%s2 + $0x20] sm:$0xff]
    %v66 = vld [vmem:[%s2 + $0x28] sm:$0xff]
    %v67 = vld [vmem:[%s2 + $0x30] sm:$0x3]
    %v68 = vld [vmem:[%s3] sm:$0xff]
    %v69 = vld [vmem:[%s3 + $0x8] sm:$0xff]
    %vm70 = vcmask 408576
    %v72 = vsel %vm70, %v59, 0
    %v75 = vsel %vm70, %v60, 0
    %vm77 = vcmask 1041408
    %v79 = vsel %vm77, %v67, 0
    %81 = vmatpush.msra.mxu0 0.0
    %82 = vmatpush.msra.mxu0 0.0
    %83 = vmatpush.msra.mxu0 0.0
    %84 = vmatpush.msra.mxu0 0.0
    %85 = vmatpush.msra.mxu0 0.0
    %86 = vmatpush.msra.mxu0 0.0
    %87 = vmatpush.msra.mxu0 0.0
    %88 = vmatpush.msra.mxu0 0.0
    %89 = vmatpush.msra.mxu0 0.0
    %90 = vmatpush.msra.mxu0 %v79
    %91 = vmatpush.msra.mxu0 %v66
    %92 = vmatpush.msra.mxu0 %v65
    %93 = vmatpush.msra.mxu0 %v64
    %94 = vmatpush.msra.mxu0 %v63
    %95 = vmatpush.msra.mxu0 %v62
    %96 = vmatpush.msra.mxu0 %v61
    %97 = vmatmul.f32.gmra.mxu0 %v72
    %v98 = vpop.f32.mrf.mxu0
    %v99 = vadd.f32 %v68, %v98
    %100 = vmatmul.f32.gmra.mxu0 %v75
    %v101 = vpop.f32.mrf.mxu0
    %v102 = vadd.f32 %v69, %v101
    %103 = vdwg.mxu0
    %v104 = vld [vmem:[%s1] sm:$0x1]
    %v105 = vld [vmem:[%s1 + $0x1] sm:$0x1]
    %vm106 = vcmp.eq.s32.totalorder %v104, 0
    %vm107 = vcmp.eq.s32.totalorder %v105, 0
    %v108 = vsel %vm106, -1e+09, 0.0
    %v109 = vsel %vm107, -1e+09, 0.0
    %vm110 = vcmask 261120
    %v111 = vsel %vm110, %v99, 0.0
    %112 = vadd.xlane.f32.xlu0 %v111
    %v113 = vpop.xlane.xlu0 %112
    %v114 = vsel %vm110, %v102, 0.0
    %115 = vadd.xlane.f32.xlu0 %v114
    %v116 = vpop.xlane.xlu0 %115
    %v117 = vrcp.pop 32.0
    %v118 = vmul.f32 32.0, %v117
    %v119 = vsub.f32 1.0, %v118
    %v120 = vmul.f32 %v117, %v119
    %v121 = vadd.f32 %v117, %v120
    %vm122 = vweird.f32 %v117
    %v123 = vsel %vm122, %v117, %v121
    %v124 = vmul.f32 %v113, %v123
    %v125 = vmul.f32 %v116, %v123
    %v126 = vsub.f32 %v99, %v124
    %v127 = vsub.f32 %v102, %v125
    %v128 = vmul.f32 %v126, %v126
    %v129 = vmul.f32 %v127, %v127
    %v130 = vsel %vm110, %v128, 0.0
    %131 = vadd.xlane.f32.xlu0 %v130
    %v132 = vpop.xlane.xlu0 %131
    %v133 = vsel %vm110, %v129, 0.0
    %134 = vadd.xlane.f32.xlu0 %v133
    %v135 = vpop.xlane.xlu0 %134
    %v136 = vmul.f32 %v132, %v123
    %v137 = vmul.f32 %v135, %v123
    %v138 = vadd.f32 %v136, 1e-05
    %v139 = vadd.f32 %v137, 1e-05
    %v140 = vrsqrt.pop %v138
    %v141 = vmul.f32 %v140, %v138
    %v142 = vmul.f32 %v141, %v140
    %v143 = vmul.f32 0.5, %v142
    %v144 = vsub.f32 1.5, %v143
    %v145 = vmul.f32 %v140, %v144
    %vm146 = vweird.f32 %v138
    %vm147 = vweird.f32 %v140
    %vm148 = vmor %vm146, %vm147
    %v149 = vsel %vm148, %v140, %v145
    %v150 = vrsqrt.pop %v139
    %v151 = vmul.f32 %v150, %v139
    %v152 = vmul.f32 %v151, %v150
    %v153 = vmul.f32 0.5, %v152
    %v154 = vsub.f32 1.5, %v153
    %v155 = vmul.f32 %v150, %v154
    %vm156 = vweird.f32 %v139
    %vm157 = vweird.f32 %v150
    %vm158 = vmor %vm156, %vm157
    %v159 = vsel %vm158, %v150, %v155
    %v160 = vmul.f32 %v126, %v149
    %v161 = vmul.f32 %v127, %v159
    %v162 = vld [vmem:[%s4] sm:$0xff]
    %v163 = vld [vmem:[%s4 + $0x8] sm:$0xff]
    %v164 = vld [vmem:[%s4 + $0x10] sm:$0xff]
    %v165 = vld [vmem:[%s4 + $0x18] sm:$0xff]
    %v166 = vld [vmem:[%s8] sm:$0x1]
    %v168 = vperm.slane %v166, 0
    %v171 = vsel %vm110, %v160, 0
    %v174 = vsel %vm110, %v161, 0
    %176 = vmatpush.msra.mxu0 0.0
    %177 = vmatpush.msra.mxu0 0.0
    %178 = vmatpush.msra.mxu0 0.0
    %179 = vmatpush.msra.mxu0 0.0
    %180 = vmatpush.msra.mxu0 0.0
    %181 = vmatpush.msra.mxu0 0.0
    %182 = vmatpush.msra.mxu0 0.0
    %183 = vmatpush.msra.mxu0 0.0
    %184 = vmatpush.msra.mxu0 0.0
    %185 = vmatpush.msra.mxu0 0.0
    %186 = vmatpush.msra.mxu0 0.0
    %187 = vmatpush.msra.mxu0 0.0
    %188 = vmatpush.msra.mxu0 %v165
    %189 = vmatpush.msra.mxu0 %v164
    %190 = vmatpush.msra.mxu0 %v163
    %191 = vmatpush.msra.mxu0 %v162
    %192 = vmatmul.f32.gmra.mxu0 %v171
    %v193 = vpop.f32.mrf.mxu0
    %v194 = vadd.f32 %v168, %v193
    %195 = vmatmul.f32.gmra.mxu0 %v174
    %v196 = vpop.f32.mrf.mxu0
    %v197 = vadd.f32 %v168, %v196
    %198 = vdwg.mxu0
    %v201 = vperm.slane %v108, 0
    %v202 = vperm.slane %v109, 0
    %206 = vrot.lane.b32.xlu0 %v194, 96
    %v207 = vpop.permute.xlu0 %206
    %vm208 = vcmask 64512
    %v209 = vsel %vm208, %v194, 0
    %v211 = vsel %vm208, %v207, 0
    %213 = vmatpush.xpose.msra.mxu0 0.0
    %214 = vmatpush.xpose.msra.mxu0 0.0
    %215 = vmatpush.xpose.msra.mxu0 0.0
    %216 = vmatpush.xpose.msra.mxu0 0.0
    %217 = vmatpush.xpose.msra.mxu0 0.0
    %218 = vmatpush.xpose.msra.mxu0 0.0
    %219 = vmatpush.xpose.msra.mxu0 0.0
    %220 = vmatpush.xpose.msra.mxu0 0.0
    %221 = vmatpush.xpose.msra.mxu0 0.0
    %222 = vmatpush.xpose.msra.mxu0 0.0
    %223 = vmatpush.xpose.msra.mxu0 0.0
    %224 = vmatpush.xpose.msra.mxu0 0.0
    %225 = vmatpush.xpose.msra.mxu0 0.0
    %226 = vmatpush.xpose.msra.mxu0 0.0
    %227 = vmatpush.xpose.msra.mxu0 0.0
    %228 = vmatpush.xpose.msra.mxu0 %v211
    %229 = vmatmul.f32.gmra.mxu0 %v209
    %v230 = vpop.f32.mrf.mxu0
    %v231 = vadd.f32 %v201, %v230
    %232 = vdwg.mxu0
    %234 = vrot.lane.b32.xlu0 %v197, 96
    %v235 = vpop.permute.xlu0 %234
    %v236 = vsel %vm208, %v197, 0
    %v238 = vsel %vm208, %v235, 0
    %240 = vmatpush.xpose.msra.mxu0 0.0
    %241 = vmatpush.xpose.msra.mxu0 0.0
    %242 = vmatpush.xpose.msra.mxu0 0.0
    %243 = vmatpush.xpose.msra.mxu0 0.0
    %244 = vmatpush.xpose.msra.mxu0 0.0
    %245 = vmatpush.xpose.msra.mxu0 0.0
    %246 = vmatpush.xpose.msra.mxu0 0.0
    %247 = vmatpush.xpose.msra.mxu0 0.0
    %248 = vmatpush.xpose.msra.mxu0 0.0
    %249 = vmatpush.xpose.msra.mxu0 0.0
    %250 = vmatpush.xpose.msra.mxu0 0.0
    %251 = vmatpush.xpose.msra.mxu0 0.0
    %252 = vmatpush.xpose.msra.mxu0 0.0
    %253 = vmatpush.xpose.msra.mxu0 0.0
    %254 = vmatpush.xpose.msra.mxu0 0.0
    %255 = vmatpush.xpose.msra.mxu0 %v238
    %256 = vmatmul.f32.gmra.mxu0 %v236
    %v257 = vpop.f32.mrf.mxu0
    %v258 = vadd.f32 %v202, %v257
    %259 = vdwg.mxu0
    %v260 = vsel %vm208, %v231, -inf
    %261 = vmax.xlane.f32.xlu0 %v260
    %v262 = vpop.xlane.xlu0 %261
    %v263 = vsel %vm208, %v258, -inf
    %264 = vmax.xlane.f32.xlu0 %v263
    %v265 = vpop.xlane.xlu0 %264
    %v266 = vsub.f32 %v231, %v262
    %v267 = vsub.f32 %v258, %v265
    %v268 = vmul.f32 %v266, 1.442695
    %v269 = vpow.pop %v268
    %v270 = vmul.f32 %v267, 1.442695
    %v271 = vpow.pop %v270
    %v272 = vsel %vm208, %v269, 0.0
    %273 = vadd.xlane.f32.xlu0 %v272
    %v274 = vpop.xlane.xlu0 %273
    %v275 = vsel %vm208, %v271, 0.0
    %276 = vadd.xlane.f32.xlu0 %v275
    %v277 = vpop.xlane.xlu0 %276
    %v278 = vrcp.pop %v274
    %v279 = vmul.f32 %v274, %v278
    %v280 = vsub.f32 1.0, %v279
    %v281 = vmul.f32 %v278, %v280
    %v282 = vadd.f32 %v278, %v281
    %vm283 = vweird.f32 %v274
    %vm284 = vweird.f32 %v278
    %vm285 = vmor %vm283, %vm284
    %v286 = vsel %vm285, %v278, %v282
    %v287 = vand.u32 2147483647, %v274
    %vm288 = vcmp.eq.f32.partialorder %v287, 8.507059e+37
    %v289 = vand.u32 %v274, 2147483648
    %v290 = vor.u32 1.1754944e-38, %v289
    %v291 = vsel %vm288, %v290, %v286
    %v292 = vmul.f32 %v269, %v291
    %v293 = vrcp.pop %v277
    %v294 = vmul.f32 %v277, %v293
    %v295 = vsub.f32 1.0, %v294
    %v296 = vmul.f32 %v293, %v295
    %v297 = vadd.f32 %v293, %v296
    %vm298 = vweird.f32 %v277
    %vm299 = vweird.f32 %v293
    %vm300 = vmor %vm298, %vm299
    %v301 = vsel %vm300, %v293, %v297
    %v302 = vand.u32 2147483647, %v277
    %vm303 = vcmp.eq.f32.partialorder %v302, 8.507059e+37
    %v304 = vand.u32 %v277, 2147483648
    %v305 = vor.u32 1.1754944e-38, %v304
    %v306 = vsel %vm303, %v305, %v301
    %v307 = vmul.f32 %v271, %v306
    %308 = vrot.lane.b32.xlu0 %v194, 64
    %v309 = vpop.permute.xlu0 %308
    %v312 = vsel %vm208, %v292, 0
    %314 = vmatpush.msra.mxu0 0.0
    %315 = vmatpush.msra.mxu0 0.0
    %316 = vmatpush.msra.mxu0 0.0
    %317 = vmatpush.msra.mxu0 0.0
    %318 = vmatpush.msra.mxu0 0.0
    %319 = vmatpush.msra.mxu0 0.0
    %320 = vmatpush.msra.mxu0 0.0
    %321 = vmatpush.msra.mxu0 0.0
    %322 = vmatpush.msra.mxu0 0.0
    %323 = vmatpush.msra.mxu0 0.0
    %324 = vmatpush.msra.mxu0 0.0
    %325 = vmatpush.msra.mxu0 0.0
    %326 = vmatpush.msra.mxu0 0.0
    %327 = vmatpush.msra.mxu0 0.0
    %328 = vmatpush.msra.mxu0 0.0
    %329 = vmatpush.msra.mxu0 %v309
    %330 = vmatmul.f32.gmra.mxu0 %v312
    %v331 = vpop.f32.mrf.mxu0
    %v332 = vadd.f32 0.0, %v331
    %333 = vdwg.mxu0
    %334 = vrot.lane.b32.xlu0 %v197, 64
    %v335 = vpop.permute.xlu0 %334
    %v338 = vsel %vm208, %v307, 0
    %340 = vmatpush.msra.mxu0 0.0
    %341 = vmatpush.msra.mxu0 0.0
    %342 = vmatpush.msra.mxu0 0.0
    %343 = vmatpush.msra.mxu0 0.0
    %344 = vmatpush.msra.mxu0 0.0
    %345 = vmatpush.msra.mxu0 0.0
    %346 = vmatpush.msra.mxu0 0.0
    %347 = vmatpush.msra.mxu0 0.0
    %348 = vmatpush.msra.mxu0 0.0
    %349 = vmatpush.msra.mxu0 0.0
    %350 = vmatpush.msra.mxu0 0.0
    %351 = vmatpush.msra.mxu0 0.0
    %352 = vmatpush.msra.mxu0 0.0
    %353 = vmatpush.msra.mxu0 0.0
    %354 = vmatpush.msra.mxu0 0.0
    %355 = vmatpush.msra.mxu0 %v335
    %356 = vmatmul.f32.gmra.mxu0 %v338
    %v357 = vpop.f32.mrf.mxu0
    %v358 = vadd.f32 0.0, %v357
    %359 = vdwg.mxu0
    %360 = vrot.lane.b32.xlu0 %v194, 120
    %v361 = vpop.permute.xlu0 %360
    %362 = vrot.lane.b32.xlu0 %v194, 88
    %v363 = vpop.permute.xlu0 %362
    %v364 = vsel %vm208, %v361, 0
    %v366 = vsel %vm208, %v363, 0
    %368 = vmatpush.xpose.msra.mxu0 0.0
    %369 = vmatpush.xpose.msra.mxu0 0.0
    %370 = vmatpush.xpose.msra.mxu0 0.0
    %371 = vmatpush.xpose.msra.mxu0 0.0
    %372 = vmatpush.xpose.msra.mxu0 0.0
    %373 = vmatpush.xpose.msra.mxu0 0.0
    %374 = vmatpush.xpose.msra.mxu0 0.0
    %375 = vmatpush.xpose.msra.mxu0 0.0
    %376 = vmatpush.xpose.msra.mxu0 0.0
    %377 = vmatpush.xpose.msra.mxu0 0.0
    %378 = vmatpush.xpose.msra.mxu0 0.0
    %379 = vmatpush.xpose.msra.mxu0 0.0
    %380 = vmatpush.xpose.msra.mxu0 0.0
    %381 = vmatpush.xpose.msra.mxu0 0.0
    %382 = vmatpush.xpose.msra.mxu0 0.0
    %383 = vmatpush.xpose.msra.mxu0 %v366
    %384 = vmatmul.f32.gmra.mxu0 %v364
    %v385 = vpop.f32.mrf.mxu0
    %v386 = vadd.f32 %v201, %v385
    %387 = vdwg.mxu0
    %388 = vrot.lane.b32.xlu0 %v197, 120
    %v389 = vpop.permute.xlu0 %388
    %390 = vrot.lane.b32.xlu0 %v197, 88
    %v391 = vpop.permute.xlu0 %390
    %v392 = vsel %vm208, %v389, 0
    %v394 = vsel %vm208, %v391, 0
    %396 = vmatpush.xpose.msra.mxu0 0.0
    %397 = vmatpush.xpose.msra.mxu0 0.0
    %398 = vmatpush.xpose.msra.mxu0 0.0
    %399 = vmatpush.xpose.msra.mxu0 0.0
    %400 = vmatpush.xpose.msra.mxu0 0.0
    %401 = vmatpush.xpose.msra.mxu0 0.0
    %402 = vmatpush.xpose.msra.mxu0 0.0
    %403 = vmatpush.xpose.msra.mxu0 0.0
    %404 = vmatpush.xpose.msra.mxu0 0.0
    %405 = vmatpush.xpose.msra.mxu0 0.0
    %406 = vmatpush.xpose.msra.mxu0 0.0
    %407 = vmatpush.xpose.msra.mxu0 0.0
    %408 = vmatpush.xpose.msra.mxu0 0.0
    %409 = vmatpush.xpose.msra.mxu0 0.0
    %410 = vmatpush.xpose.msra.mxu0 0.0
    %411 = vmatpush.xpose.msra.mxu0 %v394
    %412 = vmatmul.f32.gmra.mxu0 %v392
    %v413 = vpop.f32.mrf.mxu0
    %v414 = vadd.f32 %v202, %v413
    %415 = vdwg.mxu0
    %v416 = vsel %vm208, %v386, -inf
    %417 = vmax.xlane.f32.xlu0 %v416
    %v418 = vpop.xlane.xlu0 %417
    %v419 = vsel %vm208, %v414, -inf
    %420 = vmax.xlane.f32.xlu0 %v419
    %v421 = vpop.xlane.xlu0 %420
    %v422 = vsub.f32 %v386, %v418
    %v423 = vsub.f32 %v414, %v421
    %v424 = vmul.f32 %v422, 1.442695
    %v425 = vpow.pop %v424
    %v426 = vmul.f32 %v423, 1.442695
    %v427 = vpow.pop %v426
    %v428 = vsel %vm208, %v425, 0.0
    %429 = vadd.xlane.f32.xlu0 %v428
    %v430 = vpop.xlane.xlu0 %429
    %v431 = vsel %vm208, %v427, 0.0
    %432 = vadd.xlane.f32.xlu0 %v431
    %v433 = vpop.xlane.xlu0 %432
    %v434 = vrcp.pop %v430
    %v435 = vmul.f32 %v430, %v434
    %v436 = vsub.f32 1.0, %v435
    %v437 = vmul.f32 %v434, %v436
    %v438 = vadd.f32 %v434, %v437
    %vm439 = vweird.f32 %v430
    %vm440 = vweird.f32 %v434
    %vm441 = vmor %vm439, %vm440
    %v442 = vsel %vm441, %v434, %v438
    %v443 = vand.u32 2147483647, %v430
    %vm444 = vcmp.eq.f32.partialorder %v443, 8.507059e+37
    %v445 = vand.u32 %v430, 2147483648
    %v446 = vor.u32 1.1754944e-38, %v445
    %v447 = vsel %vm444, %v446, %v442
    %v448 = vmul.f32 %v425, %v447
    %v449 = vrcp.pop %v433
    %v450 = vmul.f32 %v433, %v449
    %v451 = vsub.f32 1.0, %v450
    %v452 = vmul.f32 %v449, %v451
    %v453 = vadd.f32 %v449, %v452
    %vm454 = vweird.f32 %v433
    %vm455 = vweird.f32 %v449
    %vm456 = vmor %vm454, %vm455
    %v457 = vsel %vm456, %v449, %v453
    %v458 = vand.u32 2147483647, %v433
    %vm459 = vcmp.eq.f32.partialorder %v458, 8.507059e+37
    %v460 = vand.u32 %v433, 2147483648
    %v461 = vor.u32 1.1754944e-38, %v460
    %v462 = vsel %vm459, %v461, %v457
    %v463 = vmul.f32 %v427, %v462
    %464 = vrot.lane.b32.xlu0 %v194, 56
    %v465 = vpop.permute.xlu0 %464
    %v468 = vsel %vm208, %v448, 0
    %470 = vmatpush.msra.mxu0 0.0
    %471 = vmatpush.msra.mxu0 0.0
    %472 = vmatpush.msra.mxu0 0.0
    %473 = vmatpush.msra.mxu0 0.0
    %474 = vmatpush.msra.mxu0 0.0
    %475 = vmatpush.msra.mxu0 0.0
    %476 = vmatpush.msra.mxu0 0.0
    %477 = vmatpush.msra.mxu0 0.0
    %478 = vmatpush.msra.mxu0 0.0
    %479 = vmatpush.msra.mxu0 0.0
    %480 = vmatpush.msra.mxu0 0.0
    %481 = vmatpush.msra.mxu0 0.0
    %482 = vmatpush.msra.mxu0 0.0
    %483 = vmatpush.msra.mxu0 0.0
    %484 = vmatpush.msra.mxu0 0.0
    %485 = vmatpush.msra.mxu0 %v465
    %486 = vmatmul.f32.gmra.mxu0 %v468
    %v487 = vpop.f32.mrf.mxu0
    %v488 = vadd.f32 0.0, %v487
    %489 = vdwg.mxu0
    %490 = vrot.lane.b32.xlu0 %v197, 56
    %v491 = vpop.permute.xlu0 %490
    %v494 = vsel %vm208, %v463, 0
    %496 = vmatpush.msra.mxu0 0.0
    %497 = vmatpush.msra.mxu0 0.0
    %498 = vmatpush.msra.mxu0 0.0
    %499 = vmatpush.msra.mxu0 0.0
    %500 = vmatpush.msra.mxu0 0.0
    %501 = vmatpush.msra.mxu0 0.0
    %502 = vmatpush.msra.mxu0 0.0
    %503 = vmatpush.msra.mxu0 0.0
    %504 = vmatpush.msra.mxu0 0.0
    %505 = vmatpush.msra.mxu0 0.0
    %506 = vmatpush.msra.mxu0 0.0
    %507 = vmatpush.msra.mxu0 0.0
    %508 = vmatpush.msra.mxu0 0.0
    %509 = vmatpush.msra.mxu0 0.0
    %510 = vmatpush.msra.mxu0 0.0
    %511 = vmatpush.msra.mxu0 %v491
    %512 = vmatmul.f32.gmra.mxu0 %v494
    %v513 = vpop.f32.mrf.mxu0
    %v514 = vadd.f32 0.0, %v513
    %515 = vdwg.mxu0
    %516 = vrot.lane.b32.xlu0 %v194, 112
    %v517 = vpop.permute.xlu0 %516
    %518 = vrot.lane.b32.xlu0 %v194, 80
    %v519 = vpop.permute.xlu0 %518
    %v520 = vsel %vm208, %v517, 0
    %v522 = vsel %vm208, %v519, 0
    %524 = vmatpush.xpose.msra.mxu0 0.0
    %525 = vmatpush.xpose.msra.mxu0 0.0
    %526 = vmatpush.xpose.msra.mxu0 0.0
    %527 = vmatpush.xpose.msra.mxu0 0.0
    %528 = vmatpush.xpose.msra.mxu0 0.0
    %529 = vmatpush.xpose.msra.mxu0 0.0
    %530 = vmatpush.xpose.msra.mxu0 0.0
    %531 = vmatpush.xpose.msra.mxu0 0.0
    %532 = vmatpush.xpose.msra.mxu0 0.0
    %533 = vmatpush.xpose.msra.mxu0 0.0
    %534 = vmatpush.xpose.msra.mxu0 0.0
    %535 = vmatpush.xpose.msra.mxu0 0.0
    %536 = vmatpush.xpose.msra.mxu0 0.0
    %537 = vmatpush.xpose.msra.mxu0 0.0
    %538 = vmatpush.xpose.msra.mxu0 0.0
    %539 = vmatpush.xpose.msra.mxu0 %v522
    %540 = vmatmul.f32.gmra.mxu0 %v520
    %v541 = vpop.f32.mrf.mxu0
    %v542 = vadd.f32 %v201, %v541
    %543 = vdwg.mxu0
    %544 = vrot.lane.b32.xlu0 %v197, 112
    %v545 = vpop.permute.xlu0 %544
    %546 = vrot.lane.b32.xlu0 %v197, 80
    %v547 = vpop.permute.xlu0 %546
    %v548 = vsel %vm208, %v545, 0
    %v550 = vsel %vm208, %v547, 0
    %552 = vmatpush.xpose.msra.mxu0 0.0
    %553 = vmatpush.xpose.msra.mxu0 0.0
    %554 = vmatpush.xpose.msra.mxu0 0.0
    %555 = vmatpush.xpose.msra.mxu0 0.0
    %556 = vmatpush.xpose.msra.mxu0 0.0
    %557 = vmatpush.xpose.msra.mxu0 0.0
    %558 = vmatpush.xpose.msra.mxu0 0.0
    %559 = vmatpush.xpose.msra.mxu0 0.0
    %560 = vmatpush.xpose.msra.mxu0 0.0
    %561 = vmatpush.xpose.msra.mxu0 0.0
    %562 = vmatpush.xpose.msra.mxu0 0.0
    %563 = vmatpush.xpose.msra.mxu0 0.0
    %564 = vmatpush.xpose.msra.mxu0 0.0
    %565 = vmatpush.xpose.msra.mxu0 0.0
    %566 = vmatpush.xpose.msra.mxu0 0.0
    %567 = vmatpush.xpose.msra.mxu0 %v550
    %568 = vmatmul.f32.gmra.mxu0 %v548
    %v569 = vpop.f32.mrf.mxu0
    %v570 = vadd.f32 %v202, %v569
    %571 = vdwg.mxu0
    %v572 = vsel %vm208, %v542, -inf
    %573 = vmax.xlane.f32.xlu0 %v572
    %v574 = vpop.xlane.xlu0 %573
    %v575 = vsel %vm208, %v570, -inf
    %576 = vmax.xlane.f32.xlu0 %v575
    %v577 = vpop.xlane.xlu0 %576
    %v578 = vsub.f32 %v542, %v574
    %v579 = vsub.f32 %v570, %v577
    %v580 = vmul.f32 %v578, 1.442695
    %v581 = vpow.pop %v580
    %v582 = vmul.f32 %v579, 1.442695
    %v583 = vpow.pop %v582
    %v584 = vsel %vm208, %v581, 0.0
    %585 = vadd.xlane.f32.xlu0 %v584
    %v586 = vpop.xlane.xlu0 %585
    %v587 = vsel %vm208, %v583, 0.0
    %588 = vadd.xlane.f32.xlu0 %v587
    %v589 = vpop.xlane.xlu0 %588
    %v590 = vrcp.pop %v586
    %v591 = vmul.f32 %v586, %v590
    %v592 = vsub.f32 1.0, %v591
    %v593 = vmul.f32 %v590, %v592
    %v594 = vadd.f32 %v590, %v593
    %vm595 = vweird.f32 %v586
    %vm596 = vweird.f32 %v590
    %vm597 = vmor %vm595, %vm596
    %v598 = vsel %vm597, %v590, %v594
    %v599 = vand.u32 2147483647, %v586
    %vm600 = vcmp.eq.f32.partialorder %v599, 8.507059e+37
    %v601 = vand.u32 %v586, 2147483648
    %v602 = vor.u32 1.1754944e-38, %v601
    %v603 = vsel %vm600, %v602, %v598
    %v604 = vmul.f32 %v581, %v603
    %v605 = vrcp.pop %v589
    %v606 = vmul.f32 %v589, %v605
    %v607 = vsub.f32 1.0, %v606
    %v608 = vmul.f32 %v605, %v607
    %v609 = vadd.f32 %v605, %v608
    %vm610 = vweird.f32 %v589
    %vm611 = vweird.f32 %v605
    %vm612 = vmor %vm610, %vm611
    %v613 = vsel %vm612, %v605, %v609
    %v614 = vand.u32 2147483647, %v589
    %vm615 = vcmp.eq.f32.partialorder %v614, 8.507059e+37
    %v616 = vand.u32 %v589, 2147483648
    %v617 = vor.u32 1.1754944e-38, %v616
    %v618 = vsel %vm615, %v617, %v613
    %v619 = vmul.f32 %v583, %v618
    %620 = vrot.lane.b32.xlu0 %v194, 48
    %v621 = vpop.permute.xlu0 %620
    %v624 = vsel %vm208, %v604, 0
    %626 = vmatpush.msra.mxu0 0.0
    %627 = vmatpush.msra.mxu0 0.0
    %628 = vmatpush.msra.mxu0 0.0
    %629 = vmatpush.msra.mxu0 0.0
    %630 = vmatpush.msra.mxu0 0.0
    %631 = vmatpush.msra.mxu0 0.0
    %632 = vmatpush.msra.mxu0 0.0
    %633 = vmatpush.msra.mxu0 0.0
    %634 = vmatpush.msra.mxu0 0.0
    %635 = vmatpush.msra.mxu0 0.0
    %636 = vmatpush.msra.mxu0 0.0
    %637 = vmatpush.msra.mxu0 0.0
    %638 = vmatpush.msra.mxu0 0.0
    %639 = vmatpush.msra.mxu0 0.0
    %640 = vmatpush.msra.mxu0 0.0
    %641 = vmatpush.msra.mxu0 %v621
    %642 = vmatmul.f32.gmra.mxu0 %v624
    %v643 = vpop.f32.mrf.mxu0
    %v644 = vadd.f32 0.0, %v643
    %645 = vdwg.mxu0
    %646 = vrot.lane.b32.xlu0 %v197, 48
    %v647 = vpop.permute.xlu0 %646
    %v650 = vsel %vm208, %v619, 0
    %652 = vmatpush.msra.mxu0 0.0
    %653 = vmatpush.msra.mxu0 0.0
    %654 = vmatpush.msra.mxu0 0.0
    %655 = vmatpush.msra.mxu0 0.0
    %656 = vmatpush.msra.mxu0 0.0
    %657 = vmatpush.msra.mxu0 0.0
    %658 = vmatpush.msra.mxu0 0.0
    %659 = vmatpush.msra.mxu0 0.0
    %660 = vmatpush.msra.mxu0 0.0
    %661 = vmatpush.msra.mxu0 0.0
    %662 = vmatpush.msra.mxu0 0.0
    %663 = vmatpush.msra.mxu0 0.0
    %664 = vmatpush.msra.mxu0 0.0
    %665 = vmatpush.msra.mxu0 0.0
    %666 = vmatpush.msra.mxu0 0.0
    %667 = vmatpush.msra.mxu0 %v647
    %668 = vmatmul.f32.gmra.mxu0 %v650
    %v669 = vpop.f32.mrf.mxu0
    %v670 = vadd.f32 0.0, %v669
    %671 = vdwg.mxu0
    %672 = vrot.lane.b32.xlu0 %v194, 104
    %v673 = vpop.permute.xlu0 %672
    %674 = vrot.lane.b32.xlu0 %v194, 72
    %v675 = vpop.permute.xlu0 %674
    %v676 = vsel %vm208, %v673, 0
    %v678 = vsel %vm208, %v675, 0
    %680 = vmatpush.xpose.msra.mxu0 0.0
    %681 = vmatpush.xpose.msra.mxu0 0.0
    %682 = vmatpush.xpose.msra.mxu0 0.0
    %683 = vmatpush.xpose.msra.mxu0 0.0
    %684 = vmatpush.xpose.msra.mxu0 0.0
    %685 = vmatpush.xpose.msra.mxu0 0.0
    %686 = vmatpush.xpose.msra.mxu0 0.0
    %687 = vmatpush.xpose.msra.mxu0 0.0
    %688 = vmatpush.xpose.msra.mxu0 0.0
    %689 = vmatpush.xpose.msra.mxu0 0.0
    %690 = vmatpush.xpose.msra.mxu0 0.0
    %691 = vmatpush.xpose.msra.mxu0 0.0
    %692 = vmatpush.xpose.msra.mxu0 0.0
    %693 = vmatpush.xpose.msra.mxu0 0.0
    %694 = vmatpush.xpose.msra.mxu0 0.0
    %695 = vmatpush.xpose.msra.mxu0 %v678
    %696 = vmatmul.f32.gmra.mxu0 %v676
    %v697 = vpop.f32.mrf.mxu0
    %v698 = vadd.f32 %v201, %v697
    %699 = vdwg.mxu0
    %700 = vrot.lane.b32.xlu0 %v197, 104
    %v701 = vpop.permute.xlu0 %700
    %702 = vrot.lane.b32.xlu0 %v197, 72
    %v703 = vpop.permute.xlu0 %702
    %v704 = vsel %vm208, %v701, 0
    %v706 = vsel %vm208, %v703, 0
    %708 = vmatpush.xpose.msra.mxu0 0.0
    %709 = vmatpush.xpose.msra.mxu0 0.0
    %710 = vmatpush.xpose.msra.mxu0 0.0
    %711 = vmatpush.xpose.msra.mxu0 0.0
    %712 = vmatpush.xpose.msra.mxu0 0.0
    %713 = vmatpush.xpose.msra.mxu0 0.0
    %714 = vmatpush.xpose.msra.mxu0 0.0
    %715 = vmatpush.xpose.msra.mxu0 0.0
    %716 = vmatpush.xpose.msra.mxu0 0.0
    %717 = vmatpush.xpose.msra.mxu0 0.0
    %718 = vmatpush.xpose.msra.mxu0 0.0
    %719 = vmatpush.xpose.msra.mxu0 0.0
    %720 = vmatpush.xpose.msra.mxu0 0.0
    %721 = vmatpush.xpose.msra.mxu0 0.0
    %722 = vmatpush.xpose.msra.mxu0 0.0
    %723 = vmatpush.xpose.msra.mxu0 %v706
    %724 = vmatmul.f32.gmra.mxu0 %v704
    %v725 = vpop.f32.mrf.mxu0
    %v726 = vadd.f32 %v202, %v725
    %727 = vdwg.mxu0
    %v728 = vsel %vm208, %v698, -inf
    %729 = vmax.xlane.f32.xlu0 %v728
    %v730 = vpop.xlane.xlu0 %729
    %v731 = vsel %vm208, %v726, -inf
    %732 = vmax.xlane.f32.xlu0 %v731
    %v733 = vpop.xlane.xlu0 %732
    %v734 = vsub.f32 %v698, %v730
    %v735 = vsub.f32 %v726, %v733
    %v736 = vmul.f32 %v734, 1.442695
    %v737 = vpow.pop %v736
    %v738 = vmul.f32 %v735, 1.442695
    %v739 = vpow.pop %v738
    %v740 = vsel %vm208, %v737, 0.0
    %741 = vadd.xlane.f32.xlu0 %v740
    %v742 = vpop.xlane.xlu0 %741
    %v743 = vsel %vm208, %v739, 0.0
    %744 = vadd.xlane.f32.xlu0 %v743
    %v745 = vpop.xlane.xlu0 %744
    %v746 = vrcp.pop %v742
    %v747 = vmul.f32 %v742, %v746
    %v748 = vsub.f32 1.0, %v747
    %v749 = vmul.f32 %v746, %v748
    %v750 = vadd.f32 %v746, %v749
    %vm751 = vweird.f32 %v742
    %vm752 = vweird.f32 %v746
    %vm753 = vmor %vm751, %vm752
    %v754 = vsel %vm753, %v746, %v750
    %v755 = vand.u32 2147483647, %v742
    %vm756 = vcmp.eq.f32.partialorder %v755, 8.507059e+37
    %v757 = vand.u32 %v742, 2147483648
    %v758 = vor.u32 1.1754944e-38, %v757
    %v759 = vsel %vm756, %v758, %v754
    %v760 = vmul.f32 %v737, %v759
    %v761 = vrcp.pop %v745
    %v762 = vmul.f32 %v745, %v761
    %v763 = vsub.f32 1.0, %v762
    %v764 = vmul.f32 %v761, %v763
    %v765 = vadd.f32 %v761, %v764
    %vm766 = vweird.f32 %v745
    %vm767 = vweird.f32 %v761
    %vm768 = vmor %vm766, %vm767
    %v769 = vsel %vm768, %v761, %v765
    %v770 = vand.u32 2147483647, %v745
    %vm771 = vcmp.eq.f32.partialorder %v770, 8.507059e+37
    %v772 = vand.u32 %v745, 2147483648
    %v773 = vor.u32 1.1754944e-38, %v772
    %v774 = vsel %vm771, %v773, %v769
    %v775 = vmul.f32 %v739, %v774
    %776 = vrot.lane.b32.xlu0 %v194, 40
    %v777 = vpop.permute.xlu0 %776
    %v780 = vsel %vm208, %v760, 0
    %782 = vmatpush.msra.mxu0 0.0
    %783 = vmatpush.msra.mxu0 0.0
    %784 = vmatpush.msra.mxu0 0.0
    %785 = vmatpush.msra.mxu0 0.0
    %786 = vmatpush.msra.mxu0 0.0
    %787 = vmatpush.msra.mxu0 0.0
    %788 = vmatpush.msra.mxu0 0.0
    %789 = vmatpush.msra.mxu0 0.0
    %790 = vmatpush.msra.mxu0 0.0
    %791 = vmatpush.msra.mxu0 0.0
    %792 = vmatpush.msra.mxu0 0.0
    %793 = vmatpush.msra.mxu0 0.0
    %794 = vmatpush.msra.mxu0 0.0
    %795 = vmatpush.msra.mxu0 0.0
    %796 = vmatpush.msra.mxu0 0.0
    %797 = vmatpush.msra.mxu0 %v777
    %798 = vmatmul.f32.gmra.mxu0 %v780
    %v799 = vpop.f32.mrf.mxu0
    %v800 = vadd.f32 0.0, %v799
    %801 = vdwg.mxu0
    %802 = vrot.lane.b32.xlu0 %v197, 40
    %v803 = vpop.permute.xlu0 %802
    %v806 = vsel %vm208, %v775, 0
    %808 = vmatpush.msra.mxu0 0.0
    %809 = vmatpush.msra.mxu0 0.0
    %810 = vmatpush.msra.mxu0 0.0
    %811 = vmatpush.msra.mxu0 0.0
    %812 = vmatpush.msra.mxu0 0.0
    %813 = vmatpush.msra.mxu0 0.0
    %814 = vmatpush.msra.mxu0 0.0
    %815 = vmatpush.msra.mxu0 0.0
    %816 = vmatpush.msra.mxu0 0.0
    %817 = vmatpush.msra.mxu0 0.0
    %818 = vmatpush.msra.mxu0 0.0
    %819 = vmatpush.msra.mxu0 0.0
    %820 = vmatpush.msra.mxu0 0.0
    %821 = vmatpush.msra.mxu0 0.0
    %822 = vmatpush.msra.mxu0 0.0
    %823 = vmatpush.msra.mxu0 %v803
    %824 = vmatmul.f32.gmra.mxu0 %v806
    %v825 = vpop.f32.mrf.mxu0
    %v826 = vadd.f32 0.0, %v825
    %827 = vdwg.mxu0
    %830 = vrot.lane.b32.xlu0 %v488, 8
    %v831 = vpop.permute.xlu0 %830
    %832 = vrot.lane.b32.xlu0 %v514, 8
    %v833 = vpop.permute.xlu0 %832
    %838 = vrot.lane.b32.xlu0 %v644, 16
    %v839 = vpop.permute.xlu0 %838
    %840 = vrot.lane.b32.xlu0 %v670, 16
    %v841 = vpop.permute.xlu0 %840
    %846 = vrot.lane.b32.xlu0 %v800, 24
    %v847 = vpop.permute.xlu0 %846
    %848 = vrot.lane.b32.xlu0 %v826, 24
    %v849 = vpop.permute.xlu0 %848
    %v852 = vsel %vm208, %v332, %v831
    %v853 = vsel %vm208, %v358, %v833
    %vm854 = vcmask 130048
    %v855 = vsel %vm854, %v852, %v839
    %v856 = vsel %vm854, %v853, %v841
    %vm857 = vcmask 195584
    %v858 = vsel %vm857, %v855, %v847
    %v859 = vsel %vm857, %v856, %v849
    %v860 = vld [vmem:[%s5] sm:$0xff]
    %v861 = vld [vmem:[%s5 + $0x8] sm:$0xff]
    %v862 = vld [vmem:[%s5 + $0x10] sm:$0xff]
    %v863 = vld [vmem:[%s5 + $0x18] sm:$0xff]
    %v865 = vsel %vm110, %v858, 0
    %v868 = vsel %vm110, %v859, 0
    %870 = vmatpush.msra.mxu0 0.0
    %871 = vmatpush.msra.mxu0 0.0
    %872 = vmatpush.msra.mxu0 0.0
    %873 = vmatpush.msra.mxu0 0.0
    %874 = vmatpush.msra.mxu0 0.0
    %875 = vmatpush.msra.mxu0 0.0
    %876 = vmatpush.msra.mxu0 0.0
    %877 = vmatpush.msra.mxu0 0.0
    %878 = vmatpush.msra.mxu0 0.0
    %879 = vmatpush.msra.mxu0 0.0
    %880 = vmatpush.msra.mxu0 0.0
    %881 = vmatpush.msra.mxu0 0.0
    %882 = vmatpush.msra.mxu0 %v863
    %883 = vmatpush.msra.mxu0 %v862
    %884 = vmatpush.msra.mxu0 %v861
    %885 = vmatpush.msra.mxu0 %v860
    %886 = vmatmul.f32.gmra.mxu0 %v865
    %v887 = vpop.f32.mrf.mxu0
    %v888 = vadd.f32 0.0, %v887
    %889 = vmatmul.f32.gmra.mxu0 %v868
    %v890 = vpop.f32.mrf.mxu0
    %v891 = vadd.f32 0.0, %v890
    %892 = vdwg.mxu0
    %v893 = vadd.f32 %v99, %v888
    %v894 = vadd.f32 %v102, %v891
    %v895 = vld [vmem:[%s9] sm:$0x1]
    %v897 = vperm.slane %v895, 0
    %v899 = vadd.f32 %v893, %v897
    %v900 = vadd.f32 %v894, %v897
    %v901 = vsel %vm110, %v899, 0.0
    %902 = vadd.xlane.f32.xlu0 %v901
    %v903 = vpop.xlane.xlu0 %902
    %v904 = vsel %vm110, %v900, 0.0
    %905 = vadd.xlane.f32.xlu0 %v904
    %v906 = vpop.xlane.xlu0 %905
    %v907 = vmul.f32 %v903, %v123
    %v908 = vmul.f32 %v906, %v123
    %v909 = vsub.f32 %v899, %v907
    %v910 = vsub.f32 %v900, %v908
    %v911 = vmul.f32 %v909, %v909
    %v912 = vmul.f32 %v910, %v910
    %v913 = vsel %vm110, %v911, 0.0
    %914 = vadd.xlane.f32.xlu0 %v913
    %v915 = vpop.xlane.xlu0 %914
    %v916 = vsel %vm110, %v912, 0.0
    %917 = vadd.xlane.f32.xlu0 %v916
    %v918 = vpop.xlane.xlu0 %917
    %v919 = vmul.f32 %v915, %v123
    %v920 = vmul.f32 %v918, %v123
    %v921 = vadd.f32 %v919, 1e-05
    %v922 = vadd.f32 %v920, 1e-05
    %v923 = vrsqrt.pop %v921
    %v924 = vmul.f32 %v923, %v921
    %v925 = vmul.f32 %v924, %v923
    %v926 = vmul.f32 0.5, %v925
    %v927 = vsub.f32 1.5, %v926
    %v928 = vmul.f32 %v923, %v927
    %vm929 = vweird.f32 %v921
    %vm930 = vweird.f32 %v923
    %vm931 = vmor %vm929, %vm930
    %v932 = vsel %vm931, %v923, %v928
    %v933 = vrsqrt.pop %v922
    %v934 = vmul.f32 %v933, %v922
    %v935 = vmul.f32 %v934, %v933
    %v936 = vmul.f32 0.5, %v935
    %v937 = vsub.f32 1.5, %v936
    %v938 = vmul.f32 %v933, %v937
    %vm939 = vweird.f32 %v922
    %vm940 = vweird.f32 %v933
    %vm941 = vmor %vm939, %vm940
    %v942 = vsel %vm941, %v933, %v938
    %v943 = vmul.f32 %v909, %v932
    %v944 = vmul.f32 %v910, %v942
    %v945 = vld [vmem:[%s6] sm:$0xff]
    %v946 = vld [vmem:[%s6 + $0x8] sm:$0xff]
    %v947 = vld [vmem:[%s6 + $0x10] sm:$0xff]
    %v948 = vld [vmem:[%s6 + $0x18] sm:$0xff]
    %v949 = vld [vmem:[%s10] sm:$0x1]
    %v951 = vperm.slane %v949, 0
    %v954 = vsel %vm110, %v943, 0
    %v957 = vsel %vm110, %v944, 0
    %959 = vmatpush.msra.mxu0 0.0
    %960 = vmatpush.msra.mxu0 0.0
    %961 = vmatpush.msra.mxu0 0.0
    %962 = vmatpush.msra.mxu0 0.0
    %963 = vmatpush.msra.mxu0 0.0
    %964 = vmatpush.msra.mxu0 0.0
    %965 = vmatpush.msra.mxu0 0.0
    %966 = vmatpush.msra.mxu0 0.0
    %967 = vmatpush.msra.mxu0 0.0
    %968 = vmatpush.msra.mxu0 0.0
    %969 = vmatpush.msra.mxu0 0.0
    %970 = vmatpush.msra.mxu0 0.0
    %971 = vmatpush.msra.mxu0 %v948
    %972 = vmatpush.msra.mxu0 %v947
    %973 = vmatpush.msra.mxu0 %v946
    %974 = vmatpush.msra.mxu0 %v945
    %975 = vmatmul.f32.gmra.mxu0 %v954
    %v976 = vpop.f32.mrf.mxu0
    %v977 = vadd.f32 %v951, %v976
    %978 = vmatmul.f32.gmra.mxu0 %v957
    %v979 = vpop.f32.mrf.mxu0
    %v980 = vadd.f32 %v951, %v979
    %981 = vdwg.mxu0
    %v982 = vmax.f32 %v977, 0.0
    %v983 = vmax.f32 %v980, 0.0
    %v984 = vld [vmem:[%s7] sm:$0xff]
    %v985 = vld [vmem:[%s7 + $0x8] sm:$0xff]
    %v986 = vld [vmem:[%s7 + $0x10] sm:$0xff]
    %v987 = vld [vmem:[%s7 + $0x18] sm:$0xff]
    %v988 = vld [vmem:[%s7 + $0x20] sm:$0xff]
    %v989 = vld [vmem:[%s7 + $0x28] sm:$0xff]
    %v990 = vld [vmem:[%s7 + $0x30] sm:$0xff]
    %v991 = vld [vmem:[%s7 + $0x38] sm:$0xff]
    %vm992 = vcmask 523264
    %v994 = vsel %vm992, %v982, 0
    %v997 = vsel %vm992, %v983, 0
    %999 = vmatpush.msra.mxu0 0.0
    %1000 = vmatpush.msra.mxu0 0.0
    %1001 = vmatpush.msra.mxu0 0.0
    %1002 = vmatpush.msra.mxu0 0.0
    %1003 = vmatpush.msra.mxu0 0.0
    %1004 = vmatpush.msra.mxu0 0.0
    %1005 = vmatpush.msra.mxu0 0.0
    %1006 = vmatpush.msra.mxu0 0.0
    %1007 = vmatpush.msra.mxu0 %v991
    %1008 = vmatpush.msra.mxu0 %v990
    %1009 = vmatpush.msra.mxu0 %v989
    %1010 = vmatpush.msra.mxu0 %v988
    %1011 = vmatpush.msra.mxu0 %v987
    %1012 = vmatpush.msra.mxu0 %v986
    %1013 = vmatpush.msra.mxu0 %v985
    %1014 = vmatpush.msra.mxu0 %v984
    %1015 = vmatmul.f32.gmra.mxu0 %v994
    %v1016 = vpop.f32.mrf.mxu0
    %v1017 = vadd.f32 0.0, %v1016
    %1018 = vmatmul.f32.gmra.mxu0 %v997
    %v1019 = vpop.f32.mrf.mxu0
    %v1020 = vadd.f32 0.0, %v1019
    %1021 = vdwg.mxu0
    %v1022 = vadd.f32 %v899, %v1017
    %v1023 = vadd.f32 %v900, %v1020
    %v1024 = vld [vmem:[%s11] sm:$0x1]
    %v1026 = vperm.slane %v1024, 0
    %v1028 = vadd.f32 %v1022, %v1026
    %v1029 = vadd.f32 %v1023, %v1026
    %v1030 = vsel %vm110, %v1028, 0.0
    %1031 = vadd.xlane.f32.xlu0 %v1030
    %v1032 = vpop.xlane.xlu0 %1031
    %v1033 = vsel %vm110, %v1029, 0.0
    %1034 = vadd.xlane.f32.xlu0 %v1033
    %v1035 = vpop.xlane.xlu0 %1034
    %v1036 = vmul.f32 %v1032, %v123
    %v1037 = vmul.f32 %v1035, %v123
    %v1038 = vsub.f32 %v1028, %v1036
    %v1039 = vsub.f32 %v1029, %v1037
    %v1040 = vmul.f32 %v1038, %v1038
    %v1041 = vmul.f32 %v1039, %v1039
    %v1042 = vsel %vm110, %v1040, 0.0
    %1043 = vadd.xlane.f32.xlu0 %v1042
    %v1044 = vpop.xlane.xlu0 %1043
    %v1045 = vsel %vm110, %v1041, 0.0
    %1046 = vadd.xlane.f32.xlu0 %v1045
    %v1047 = vpop.xlane.xlu0 %1046
    %v1048 = vmul.f32 %v1044, %v123
    %v1049 = vmul.f32 %v1047, %v123
    %v1050 = vadd.f32 %v1048, 1e-05
    %v1051 = vadd.f32 %v1049, 1e-05
    %v1052 = vrsqrt.pop %v1050
    %v1053 = vmul.f32 %v1052, %v1050
    %v1054 = vmul.f32 %v1053, %v1052
    %v1055 = vmul.f32 0.5, %v1054
    %v1056 = vsub.f32 1.5, %v1055
    %v1057 = vmul.f32 %v1052, %v1056
    %vm1058 = vweird.f32 %v1050
    %vm1059 = vweird.f32 %v1052
    %vm1060 = vmor %vm1058, %vm1059
    %v1061 = vsel %vm1060, %v1052, %v1057
    %v1062 = vrsqrt.pop %v1051
    %v1063 = vmul.f32 %v1062, %v1051
    %v1064 = vmul.f32 %v1063, %v1062
    %v1065 = vmul.f32 0.5, %v1064
    %v1066 = vsub.f32 1.5, %v1065
    %v1067 = vmul.f32 %v1062, %v1066
    %vm1068 = vweird.f32 %v1051
    %vm1069 = vweird.f32 %v1062
    %vm1070 = vmor %vm1068, %vm1069
    %v1071 = vsel %vm1070, %v1062, %v1067
    %v1072 = vmul.f32 %v1038, %v1061
    %v1073 = vmul.f32 %v1039, %v1071
    %s1074 = scalar_lea.vmem %s4, 32
    %v1075 = vld [vmem:[%s1074] sm:$0xff]
    %v1076 = vld [vmem:[%s1074 + $0x8] sm:$0xff]
    %v1077 = vld [vmem:[%s1074 + $0x10] sm:$0xff]
    %v1078 = vld [vmem:[%s1074 + $0x18] sm:$0xff]
    %s1079 = scalar_lea.vmem %s8, 1
    %v1080 = vld [vmem:[%s1079] sm:$0x1]
    %v1082 = vperm.slane %v1080, 0
    %v1085 = vsel %vm110, %v1072, 0
    %v1088 = vsel %vm110, %v1073, 0
    %1090 = vmatpush.msra.mxu0 0.0
    %1091 = vmatpush.msra.mxu0 0.0
    %1092 = vmatpush.msra.mxu0 0.0
    %1093 = vmatpush.msra.mxu0 0.0
    %1094 = vmatpush.msra.mxu0 0.0
    %1095 = vmatpush.msra.mxu0 0.0
    %1096 = vmatpush.msra.mxu0 0.0
    %1097 = vmatpush.msra.mxu0 0.0
    %1098 = vmatpush.msra.mxu0 0.0
    %1099 = vmatpush.msra.mxu0 0.0
    %1100 = vmatpush.msra.mxu0 0.0
    %1101 = vmatpush.msra.mxu0 0.0
    %1102 = vmatpush.msra.mxu0 %v1078
    %1103 = vmatpush.msra.mxu0 %v1077
    %1104 = vmatpush.msra.mxu0 %v1076
    %1105 = vmatpush.msra.mxu0 %v1075
    %1106 = vmatmul.f32.gmra.mxu0 %v1085
    %v1107 = vpop.f32.mrf.mxu0
    %v1108 = vadd.f32 %v1082, %v1107
    %1109 = vmatmul.f32.gmra.mxu0 %v1088
    %v1110 = vpop.f32.mrf.mxu0
    %v1111 = vadd.f32 %v1082, %v1110
    %1112 = vdwg.mxu0
    %1114 = vrot.lane.b32.xlu0 %v1108, 96
    %v1115 = vpop.permute.xlu0 %1114
    %v1116 = vsel %vm208, %v1108, 0
    %v1118 = vsel %vm208, %v1115, 0
    %1120 = vmatpush.xpose.msra.mxu0 0.0
    %1121 = vmatpush.xpose.msra.mxu0 0.0
    %1122 = vmatpush.xpose.msra.mxu0 0.0
    %1123 = vmatpush.xpose.msra.mxu0 0.0
    %1124 = vmatpush.xpose.msra.mxu0 0.0
    %1125 = vmatpush.xpose.msra.mxu0 0.0
    %1126 = vmatpush.xpose.msra.mxu0 0.0
    %1127 = vmatpush.xpose.msra.mxu0 0.0
    %1128 = vmatpush.xpose.msra.mxu0 0.0
    %1129 = vmatpush.xpose.msra.mxu0 0.0
    %1130 = vmatpush.xpose.msra.mxu0 0.0
    %1131 = vmatpush.xpose.msra.mxu0 0.0
    %1132 = vmatpush.xpose.msra.mxu0 0.0
    %1133 = vmatpush.xpose.msra.mxu0 0.0
    %1134 = vmatpush.xpose.msra.mxu0 0.0
    %1135 = vmatpush.xpose.msra.mxu0 %v1118
    %1136 = vmatmul.f32.gmra.mxu0 %v1116
    %v1137 = vpop.f32.mrf.mxu0
    %v1138 = vadd.f32 %v201, %v1137
    %1139 = vdwg.mxu0
    %1141 = vrot.lane.b32.xlu0 %v1111, 96
    %v1142 = vpop.permute.xlu0 %1141
    %v1143 = vsel %vm208, %v1111, 0
    %v1145 = vsel %vm208, %v1142, 0
    %1147 = vmatpush.xpose.msra.mxu0 0.0
    %1148 = vmatpush.xpose.msra.mxu0 0.0
    %1149 = vmatpush.xpose.msra.mxu0 0.0
    %1150 = vmatpush.xpose.msra.mxu0 0.0
    %1151 = vmatpush.xpose.msra.mxu0 0.0
    %1152 = vmatpush.xpose.msra.mxu0 0.0
    %1153 = vmatpush.xpose.msra.mxu0 0.0
    %1154 = vmatpush.xpose.msra.mxu0 0.0
    %1155 = vmatpush.xpose.msra.mxu0 0.0
    %1156 = vmatpush.xpose.msra.mxu0 0.0
    %1157 = vmatpush.xpose.msra.mxu0 0.0
    %1158 = vmatpush.xpose.msra.mxu0 0.0
    %1159 = vmatpush.xpose.msra.mxu0 0.0
    %1160 = vmatpush.xpose.msra.mxu0 0.0
    %1161 = vmatpush.xpose.msra.mxu0 0.0
    %1162 = vmatpush.xpose.msra.mxu0 %v1145
    %1163 = vmatmul.f32.gmra.mxu0 %v1143
    %v1164 = vpop.f32.mrf.mxu0
    %v1165 = vadd.f32 %v202, %v1164
    %1166 = vdwg.mxu0
    %v1167 = vsel %vm208, %v1138, -inf
    %1168 = vmax.xlane.f32.xlu0 %v1167
    %v1169 = vpop.xlane.xlu0 %1168
    %v1170 = vsel %vm208, %v1165, -inf
    %1171 = vmax.xlane.f32.xlu0 %v1170
    %v1172 = vpop.xlane.xlu0 %1171
    %v1173 = vsub.f32 %v1138, %v1169
    %v1174 = vsub.f32 %v1165, %v1172
    %v1175 = vmul.f32 %v1173, 1.442695
    %v1176 = vpow.pop %v1175
    %v1177 = vmul.f32 %v1174, 1.442695
    %v1178 = vpow.pop %v1177
    %v1179 = vsel %vm208, %v1176, 0.0
    %1180 = vadd.xlane.f32.xlu0 %v1179
    %v1181 = vpop.xlane.xlu0 %1180
    %v1182 = vsel %vm208, %v1178, 0.0
    %1183 = vadd.xlane.f32.xlu0 %v1182
    %v1184 = vpop.xlane.xlu0 %1183
    %v1185 = vrcp.pop %v1181
    %v1186 = vmul.f32 %v1181, %v1185
    %v1187 = vsub.f32 1.0, %v1186
    %v1188 = vmul.f32 %v1185, %v1187
    %v1189 = vadd.f32 %v1185, %v1188
    %vm1190 = vweird.f32 %v1181
    %vm1191 = vweird.f32 %v1185
    %vm1192 = vmor %vm1190, %vm1191
    %v1193 = vsel %vm1192, %v1185, %v1189
    %v1194 = vand.u32 2147483647, %v1181
    %vm1195 = vcmp.eq.f32.partialorder %v1194, 8.507059e+37
    %v1196 = vand.u32 %v1181, 2147483648
    %v1197 = vor.u32 1.1754944e-38, %v1196
    %v1198 = vsel %vm1195, %v1197, %v1193
    %v1199 = vmul.f32 %v1176, %v1198
    %v1200 = vrcp.pop %v1184
    %v1201 = vmul.f32 %v1184, %v1200
    %v1202 = vsub.f32 1.0, %v1201
    %v1203 = vmul.f32 %v1200, %v1202
    %v1204 = vadd.f32 %v1200, %v1203
    %vm1205 = vweird.f32 %v1184
    %vm1206 = vweird.f32 %v1200
    %vm1207 = vmor %vm1205, %vm1206
    %v1208 = vsel %vm1207, %v1200, %v1204
    %v1209 = vand.u32 2147483647, %v1184
    %vm1210 = vcmp.eq.f32.partialorder %v1209, 8.507059e+37
    %v1211 = vand.u32 %v1184, 2147483648
    %v1212 = vor.u32 1.1754944e-38, %v1211
    %v1213 = vsel %vm1210, %v1212, %v1208
    %v1214 = vmul.f32 %v1178, %v1213
    %1215 = vrot.lane.b32.xlu0 %v1108, 64
    %v1216 = vpop.permute.xlu0 %1215
    %v1219 = vsel %vm208, %v1199, 0
    %1221 = vmatpush.msra.mxu0 0.0
    %1222 = vmatpush.msra.mxu0 0.0
    %1223 = vmatpush.msra.mxu0 0.0
    %1224 = vmatpush.msra.mxu0 0.0
    %1225 = vmatpush.msra.mxu0 0.0
    %1226 = vmatpush.msra.mxu0 0.0
    %1227 = vmatpush.msra.mxu0 0.0
    %1228 = vmatpush.msra.mxu0 0.0
    %1229 = vmatpush.msra.mxu0 0.0
    %1230 = vmatpush.msra.mxu0 0.0
    %1231 = vmatpush.msra.mxu0 0.0
    %1232 = vmatpush.msra.mxu0 0.0
    %1233 = vmatpush.msra.mxu0 0.0
    %1234 = vmatpush.msra.mxu0 0.0
    %1235 = vmatpush.msra.mxu0 0.0
    %1236 = vmatpush.msra.mxu0 %v1216
    %1237 = vmatmul.f32.gmra.mxu0 %v1219
    %v1238 = vpop.f32.mrf.mxu0
    %v1239 = vadd.f32 0.0, %v1238
    %1240 = vdwg.mxu0
    %1241 = vrot.lane.b32.xlu0 %v1111, 64
    %v1242 = vpop.permute.xlu0 %1241
    %v1245 = vsel %vm208, %v1214, 0
    %1247 = vmatpush.msra.mxu0 0.0
    %1248 = vmatpush.msra.mxu0 0.0
    %1249 = vmatpush.msra.mxu0 0.0
    %1250 = vmatpush.msra.mxu0 0.0
    %1251 = vmatpush.msra.mxu0 0.0
    %1252 = vmatpush.msra.mxu0 0.0
    %1253 = vmatpush.msra.mxu0 0.0
    %1254 = vmatpush.msra.mxu0 0.0
    %1255 = vmatpush.msra.mxu0 0.0
    %1256 = vmatpush.msra.mxu0 0.0
    %1257 = vmatpush.msra.mxu0 0.0
    %1258 = vmatpush.msra.mxu0 0.0
    %1259 = vmatpush.msra.mxu0 0.0
    %1260 = vmatpush.msra.mxu0 0.0
    %1261 = vmatpush.msra.mxu0 0.0
    %1262 = vmatpush.msra.mxu0 %v1242
    %1263 = vmatmul.f32.gmra.mxu0 %v1245
    %v1264 = vpop.f32.mrf.mxu0
    %v1265 = vadd.f32 0.0, %v1264
    %1266 = vdwg.mxu0
    %1267 = vrot.lane.b32.xlu0 %v1108, 120
    %v1268 = vpop.permute.xlu0 %1267
    %1269 = vrot.lane.b32.xlu0 %v1108, 88
    %v1270 = vpop.permute.xlu0 %1269
    %v1271 = vsel %vm208, %v1268, 0
    %v1273 = vsel %vm208, %v1270, 0
    %1275 = vmatpush.xpose.msra.mxu0 0.0
    %1276 = vmatpush.xpose.msra.mxu0 0.0
    %1277 = vmatpush.xpose.msra.mxu0 0.0
    %1278 = vmatpush.xpose.msra.mxu0 0.0
    %1279 = vmatpush.xpose.msra.mxu0 0.0
    %1280 = vmatpush.xpose.msra.mxu0 0.0
    %1281 = vmatpush.xpose.msra.mxu0 0.0
    %1282 = vmatpush.xpose.msra.mxu0 0.0
    %1283 = vmatpush.xpose.msra.mxu0 0.0
    %1284 = vmatpush.xpose.msra.mxu0 0.0
    %1285 = vmatpush.xpose.msra.mxu0 0.0
    %1286 = vmatpush.xpose.msra.mxu0 0.0
    %1287 = vmatpush.xpose.msra.mxu0 0.0
    %1288 = vmatpush.xpose.msra.mxu0 0.0
    %1289 = vmatpush.xpose.msra.mxu0 0.0
    %1290 = vmatpush.xpose.msra.mxu0 %v1273
    %1291 = vmatmul.f32.gmra.mxu0 %v1271
    %v1292 = vpop.f32.mrf.mxu0
    %v1293 = vadd.f32 %v201, %v1292
    %1294 = vdwg.mxu0
    %1295 = vrot.lane.b32.xlu0 %v1111, 120
    %v1296 = vpop.permute.xlu0 %1295
    %1297 = vrot.lane.b32.xlu0 %v1111, 88
    %v1298 = vpop.permute.xlu0 %1297
    %v1299 = vsel %vm208, %v1296, 0
    %v1301 = vsel %vm208, %v1298, 0
    %1303 = vmatpush.xpose.msra.mxu0 0.0
    %1304 = vmatpush.xpose.msra.mxu0 0.0
    %1305 = vmatpush.xpose.msra.mxu0 0.0
    %1306 = vmatpush.xpose.msra.mxu0 0.0
    %1307 = vmatpush.xpose.msra.mxu0 0.0
    %1308 = vmatpush.xpose.msra.mxu0 0.0
    %1309 = vmatpush.xpose.msra.mxu0 0.0
    %1310 = vmatpush.xpose.msra.mxu0 0.0
    %1311 = vmatpush.xpose.msra.mxu0 0.0
    %1312 = vmatpush.xpose.msra.mxu0 0.0
    %1313 = vmatpush.xpose.msra.mxu0 0.0
    %1314 = vmatpush.xpose.msra.mxu0 0.0
    %1315 = vmatpush.xpose.msra.mxu0 0.0
    %1316 = vmatpush.xpose.msra.mxu0 0.0
    %1317 = vmatpush.xpose.msra.mxu0 0.0
    %1318 = vmatpush.xpose.msra.mxu0 %v1301
    %1319 = vmatmul.f32.gmra.mxu0 %v1299
    %v1320 = vpop.f32.mrf.mxu0
    %v1321 = vadd.f32 %v202, %v1320
    %1322 = vdwg.mxu0
    %v1323 = vsel %vm208, %v1293, -inf
    %1324 = vmax.xlane.f32.xlu0 %v1323
    %v1325 = vpop.xlane.xlu0 %1324
    %v1326 = vsel %vm208, %v1321, -inf
    %1327 = vmax.xlane.f32.xlu0 %v1326
    %v1328 = vpop.xlane.xlu0 %1327
    %v1329 = vsub.f32 %v1293, %v1325
    %v1330 = vsub.f32 %v1321, %v1328
    %v1331 = vmul.f32 %v1329, 1.442695
    %v1332 = vpow.pop %v1331
    %v1333 = vmul.f32 %v1330, 1.442695
    %v1334 = vpow.pop %v1333
    %v1335 = vsel %vm208, %v1332, 0.0
    %1336 = vadd.xlane.f32.xlu0 %v1335
    %v1337 = vpop.xlane.xlu0 %1336
    %v1338 = vsel %vm208, %v1334, 0.0
    %1339 = vadd.xlane.f32.xlu0 %v1338
    %v1340 = vpop.xlane.xlu0 %1339
    %v1341 = vrcp.pop %v1337
    %v1342 = vmul.f32 %v1337, %v1341
    %v1343 = vsub.f32 1.0, %v1342
    %v1344 = vmul.f32 %v1341, %v1343
    %v1345 = vadd.f32 %v1341, %v1344
    %vm1346 = vweird.f32 %v1337
    %vm1347 = vweird.f32 %v1341
    %vm1348 = vmor %vm1346, %vm1347
    %v1349 = vsel %vm1348, %v1341, %v1345
    %v1350 = vand.u32 2147483647, %v1337
    %vm1351 = vcmp.eq.f32.partialorder %v1350, 8.507059e+37
    %v1352 = vand.u32 %v1337, 2147483648
    %v1353 = vor.u32 1.1754944e-38, %v1352
    %v1354 = vsel %vm1351, %v1353, %v1349
    %v1355 = vmul.f32 %v1332, %v1354
    %v1356 = vrcp.pop %v1340
    %v1357 = vmul.f32 %v1340, %v1356
    %v1358 = vsub.f32 1.0, %v1357
    %v1359 = vmul.f32 %v1356, %v1358
    %v1360 = vadd.f32 %v1356, %v1359
    %vm1361 = vweird.f32 %v1340
    %vm1362 = vweird.f32 %v1356
    %vm1363 = vmor %vm1361, %vm1362
    %v1364 = vsel %vm1363, %v1356, %v1360
    %v1365 = vand.u32 2147483647, %v1340
    %vm1366 = vcmp.eq.f32.partialorder %v1365, 8.507059e+37
    %v1367 = vand.u32 %v1340, 2147483648
    %v1368 = vor.u32 1.1754944e-38, %v1367
    %v1369 = vsel %vm1366, %v1368, %v1364
    %v1370 = vmul.f32 %v1334, %v1369
    %1371 = vrot.lane.b32.xlu0 %v1108, 56
    %v1372 = vpop.permute.xlu0 %1371
    %v1375 = vsel %vm208, %v1355, 0
    %1377 = vmatpush.msra.mxu0 0.0
    %1378 = vmatpush.msra.mxu0 0.0
    %1379 = vmatpush.msra.mxu0 0.0
    %1380 = vmatpush.msra.mxu0 0.0
    %1381 = vmatpush.msra.mxu0 0.0
    %1382 = vmatpush.msra.mxu0 0.0
    %1383 = vmatpush.msra.mxu0 0.0
    %1384 = vmatpush.msra.mxu0 0.0
    %1385 = vmatpush.msra.mxu0 0.0
    %1386 = vmatpush.msra.mxu0 0.0
    %1387 = vmatpush.msra.mxu0 0.0
    %1388 = vmatpush.msra.mxu0 0.0
    %1389 = vmatpush.msra.mxu0 0.0
    %1390 = vmatpush.msra.mxu0 0.0
    %1391 = vmatpush.msra.mxu0 0.0
    %1392 = vmatpush.msra.mxu0 %v1372
    %1393 = vmatmul.f32.gmra.mxu0 %v1375
    %v1394 = vpop.f32.mrf.mxu0
    %v1395 = vadd.f32 0.0, %v1394
    %1396 = vdwg.mxu0
    %1397 = vrot.lane.b32.xlu0 %v1111, 56
    %v1398 = vpop.permute.xlu0 %1397
    %v1401 = vsel %vm208, %v1370, 0
    %1403 = vmatpush.msra.mxu0 0.0
    %1404 = vmatpush.msra.mxu0 0.0
    %1405 = vmatpush.msra.mxu0 0.0
    %1406 = vmatpush.msra.mxu0 0.0
    %1407 = vmatpush.msra.mxu0 0.0
    %1408 = vmatpush.msra.mxu0 0.0
    %1409 = vmatpush.msra.mxu0 0.0
    %1410 = vmatpush.msra.mxu0 0.0
    %1411 = vmatpush.msra.mxu0 0.0
    %1412 = vmatpush.msra.mxu0 0.0
    %1413 = vmatpush.msra.mxu0 0.0
    %1414 = vmatpush.msra.mxu0 0.0
    %1415 = vmatpush.msra.mxu0 0.0
    %1416 = vmatpush.msra.mxu0 0.0
    %1417 = vmatpush.msra.mxu0 0.0
    %1418 = vmatpush.msra.mxu0 %v1398
    %1419 = vmatmul.f32.gmra.mxu0 %v1401
    %v1420 = vpop.f32.mrf.mxu0
    %v1421 = vadd.f32 0.0, %v1420
    %1422 = vdwg.mxu0
    %1423 = vrot.lane.b32.xlu0 %v1108, 112
    %v1424 = vpop.permute.xlu0 %1423
    %1425 = vrot.lane.b32.xlu0 %v1108, 80
    %v1426 = vpop.permute.xlu0 %1425
    %v1427 = vsel %vm208, %v1424, 0
    %v1429 = vsel %vm208, %v1426, 0
    %1431 = vmatpush.xpose.msra.mxu0 0.0
    %1432 = vmatpush.xpose.msra.mxu0 0.0
    %1433 = vmatpush.xpose.msra.mxu0 0.0
    %1434 = vmatpush.xpose.msra.mxu0 0.0
    %1435 = vmatpush.xpose.msra.mxu0 0.0
    %1436 = vmatpush.xpose.msra.mxu0 0.0
    %1437 = vmatpush.xpose.msra.mxu0 0.0
    %1438 = vmatpush.xpose.msra.mxu0 0.0
    %1439 = vmatpush.xpose.msra.mxu0 0.0
    %1440 = vmatpush.xpose.msra.mxu0 0.0
    %1441 = vmatpush.xpose.msra.mxu0 0.0
    %1442 = vmatpush.xpose.msra.mxu0 0.0
    %1443 = vmatpush.xpose.msra.mxu0 0.0
    %1444 = vmatpush.xpose.msra.mxu0 0.0
    %1445 = vmatpush.xpose.msra.mxu0 0.0
    %1446 = vmatpush.xpose.msra.mxu0 %v1429
    %1447 = vmatmul.f32.gmra.mxu0 %v1427
    %v1448 = vpop.f32.mrf.mxu0
    %v1449 = vadd.f32 %v201, %v1448
    %1450 = vdwg.mxu0
    %1451 = vrot.lane.b32.xlu0 %v1111, 112
    %v1452 = vpop.permute.xlu0 %1451
    %1453 = vrot.lane.b32.xlu0 %v1111, 80
    %v1454 = vpop.permute.xlu0 %1453
    %v1455 = vsel %vm208, %v1452, 0
    %v1457 = vsel %vm208, %v1454, 0
    %1459 = vmatpush.xpose.msra.mxu0 0.0
    %1460 = vmatpush.xpose.msra.mxu0 0.0
    %1461 = vmatpush.xpose.msra.mxu0 0.0
    %1462 = vmatpush.xpose.msra.mxu0 0.0
    %1463 = vmatpush.xpose.msra.mxu0 0.0
    %1464 = vmatpush.xpose.msra.mxu0 0.0
    %1465 = vmatpush.xpose.msra.mxu0 0.0
    %1466 = vmatpush.xpose.msra.mxu0 0.0
    %1467 = vmatpush.xpose.msra.mxu0 0.0
    %1468 = vmatpush.xpose.msra.mxu0 0.0
    %1469 = vmatpush.xpose.msra.mxu0 0.0
    %1470 = vmatpush.xpose.msra.mxu0 0.0
    %1471 = vmatpush.xpose.msra.mxu0 0.0
    %1472 = vmatpush.xpose.msra.mxu0 0.0
    %1473 = vmatpush.xpose.msra.mxu0 0.0
    %1474 = vmatpush.xpose.msra.mxu0 %v1457
    %1475 = vmatmul.f32.gmra.mxu0 %v1455
    %v1476 = vpop.f32.mrf.mxu0
    %v1477 = vadd.f32 %v202, %v1476
    %1478 = vdwg.mxu0
    %v1479 = vsel %vm208, %v1449, -inf
    %1480 = vmax.xlane.f32.xlu0 %v1479
    %v1481 = vpop.xlane.xlu0 %1480
    %v1482 = vsel %vm208, %v1477, -inf
    %1483 = vmax.xlane.f32.xlu0 %v1482
    %v1484 = vpop.xlane.xlu0 %1483
    %v1485 = vsub.f32 %v1449, %v1481
    %v1486 = vsub.f32 %v1477, %v1484
    %v1487 = vmul.f32 %v1485, 1.442695
    %v1488 = vpow.pop %v1487
    %v1489 = vmul.f32 %v1486, 1.442695
    %v1490 = vpow.pop %v1489
    %v1491 = vsel %vm208, %v1488, 0.0
    %1492 = vadd.xlane.f32.xlu0 %v1491
    %v1493 = vpop.xlane.xlu0 %1492
    %v1494 = vsel %vm208, %v1490, 0.0
    %1495 = vadd.xlane.f32.xlu0 %v1494
    %v1496 = vpop.xlane.xlu0 %1495
    %v1497 = vrcp.pop %v1493
    %v1498 = vmul.f32 %v1493, %v1497
    %v1499 = vsub.f32 1.0, %v1498
    %v1500 = vmul.f32 %v1497, %v1499
    %v1501 = vadd.f32 %v1497, %v1500
    %vm1502 = vweird.f32 %v1493
    %vm1503 = vweird.f32 %v1497
    %vm1504 = vmor %vm1502, %vm1503
    %v1505 = vsel %vm1504, %v1497, %v1501
    %v1506 = vand.u32 2147483647, %v1493
    %vm1507 = vcmp.eq.f32.partialorder %v1506, 8.507059e+37
    %v1508 = vand.u32 %v1493, 2147483648
    %v1509 = vor.u32 1.1754944e-38, %v1508
    %v1510 = vsel %vm1507, %v1509, %v1505
    %v1511 = vmul.f32 %v1488, %v1510
    %v1512 = vrcp.pop %v1496
    %v1513 = vmul.f32 %v1496, %v1512
    %v1514 = vsub.f32 1.0, %v1513
    %v1515 = vmul.f32 %v1512, %v1514
    %v1516 = vadd.f32 %v1512, %v1515
    %vm1517 = vweird.f32 %v1496
    %vm1518 = vweird.f32 %v1512
    %vm1519 = vmor %vm1517, %vm1518
    %v1520 = vsel %vm1519, %v1512, %v1516
    %v1521 = vand.u32 2147483647, %v1496
    %vm1522 = vcmp.eq.f32.partialorder %v1521, 8.507059e+37
    %v1523 = vand.u32 %v1496, 2147483648
    %v1524 = vor.u32 1.1754944e-38, %v1523
    %v1525 = vsel %vm1522, %v1524, %v1520
    %v1526 = vmul.f32 %v1490, %v1525
    %1527 = vrot.lane.b32.xlu0 %v1108, 48
    %v1528 = vpop.permute.xlu0 %1527
    %v1531 = vsel %vm208, %v1511, 0
    %1533 = vmatpush.msra.mxu0 0.0
    %1534 = vmatpush.msra.mxu0 0.0
    %1535 = vmatpush.msra.mxu0 0.0
    %1536 = vmatpush.msra.mxu0 0.0
    %1537 = vmatpush.msra.mxu0 0.0
    %1538 = vmatpush.msra.mxu0 0.0
    %1539 = vmatpush.msra.mxu0 0.0
    %1540 = vmatpush.msra.mxu0 0.0
    %1541 = vmatpush.msra.mxu0 0.0
    %1542 = vmatpush.msra.mxu0 0.0
    %1543 = vmatpush.msra.mxu0 0.0
    %1544 = vmatpush.msra.mxu0 0.0
    %1545 = vmatpush.msra.mxu0 0.0
    %1546 = vmatpush.msra.mxu0 0.0
    %1547 = vmatpush.msra.mxu0 0.0
    %1548 = vmatpush.msra.mxu0 %v1528
    %1549 = vmatmul.f32.gmra.mxu0 %v1531
    %v1550 = vpop.f32.mrf.mxu0
    %v1551 = vadd.f32 0.0, %v1550
    %1552 = vdwg.mxu0
    %1553 = vrot.lane.b32.xlu0 %v1111, 48
    %v1554 = vpop.permute.xlu0 %1553
    %v1557 = vsel %vm208, %v1526, 0
    %1559 = vmatpush.msra.mxu0 0.0
    %1560 = vmatpush.msra.mxu0 0.0
    %1561 = vmatpush.msra.mxu0 0.0
    %1562 = vmatpush.msra.mxu0 0.0
    %1563 = vmatpush.msra.mxu0 0.0
    %1564 = vmatpush.msra.mxu0 0.0
    %1565 = vmatpush.msra.mxu0 0.0
    %1566 = vmatpush.msra.mxu0 0.0
    %1567 = vmatpush.msra.mxu0 0.0
    %1568 = vmatpush.msra.mxu0 0.0
    %1569 = vmatpush.msra.mxu0 0.0
    %1570 = vmatpush.msra.mxu0 0.0
    %1571 = vmatpush.msra.mxu0 0.0
    %1572 = vmatpush.msra.mxu0 0.0
    %1573 = vmatpush.msra.mxu0 0.0
    %1574 = vmatpush.msra.mxu0 %v1554
    %1575 = vmatmul.f32.gmra.mxu0 %v1557
    %v1576 = vpop.f32.mrf.mxu0
    %v1577 = vadd.f32 0.0, %v1576
    %1578 = vdwg.mxu0
    %1579 = vrot.lane.b32.xlu0 %v1108, 104
    %v1580 = vpop.permute.xlu0 %1579
    %1581 = vrot.lane.b32.xlu0 %v1108, 72
    %v1582 = vpop.permute.xlu0 %1581
    %v1583 = vsel %vm208, %v1580, 0
    %v1585 = vsel %vm208, %v1582, 0
    %1587 = vmatpush.xpose.msra.mxu0 0.0
    %1588 = vmatpush.xpose.msra.mxu0 0.0
    %1589 = vmatpush.xpose.msra.mxu0 0.0
    %1590 = vmatpush.xpose.msra.mxu0 0.0
    %1591 = vmatpush.xpose.msra.mxu0 0.0
    %1592 = vmatpush.xpose.msra.mxu0 0.0
    %1593 = vmatpush.xpose.msra.mxu0 0.0
    %1594 = vmatpush.xpose.msra.mxu0 0.0
    %1595 = vmatpush.xpose.msra.mxu0 0.0
    %1596 = vmatpush.xpose.msra.mxu0 0.0
    %1597 = vmatpush.xpose.msra.mxu0 0.0
    %1598 = vmatpush.xpose.msra.mxu0 0.0
    %1599 = vmatpush.xpose.msra.mxu0 0.0
    %1600 = vmatpush.xpose.msra.mxu0 0.0
    %1601 = vmatpush.xpose.msra.mxu0 0.0
    %1602 = vmatpush.xpose.msra.mxu0 %v1585
    %1603 = vmatmul.f32.gmra.mxu0 %v1583
    %v1604 = vpop.f32.mrf.mxu0
    %v1605 = vadd.f32 %v201, %v1604
    %1606 = vdwg.mxu0
    %1607 = vrot.lane.b32.xlu0 %v1111, 104
    %v1608 = vpop.permute.xlu0 %1607
    %1609 = vrot.lane.b32.xlu0 %v1111, 72
    %v1610 = vpop.permute.xlu0 %1609
    %v1611 = vsel %vm208, %v1608, 0
    %v1613 = vsel %vm208, %v1610, 0
    %1615 = vmatpush.xpose.msra.mxu0 0.0
    %1616 = vmatpush.xpose.msra.mxu0 0.0
    %1617 = vmatpush.xpose.msra.mxu0 0.0
    %1618 = vmatpush.xpose.msra.mxu0 0.0
    %1619 = vmatpush.xpose.msra.mxu0 0.0
    %1620 = vmatpush.xpose.msra.mxu0 0.0
    %1621 = vmatpush.xpose.msra.mxu0 0.0
    %1622 = vmatpush.xpose.msra.mxu0 0.0
    %1623 = vmatpush.xpose.msra.mxu0 0.0
    %1624 = vmatpush.xpose.msra.mxu0 0.0
    %1625 = vmatpush.xpose.msra.mxu0 0.0
    %1626 = vmatpush.xpose.msra.mxu0 0.0
    %1627 = vmatpush.xpose.msra.mxu0 0.0
    %1628 = vmatpush.xpose.msra.mxu0 0.0
    %1629 = vmatpush.xpose.msra.mxu0 0.0
    %1630 = vmatpush.xpose.msra.mxu0 %v1613
    %1631 = vmatmul.f32.gmra.mxu0 %v1611
    %v1632 = vpop.f32.mrf.mxu0
    %v1633 = vadd.f32 %v202, %v1632
    %1634 = vdwg.mxu0
    %v1635 = vsel %vm208, %v1605, -inf
    %1636 = vmax.xlane.f32.xlu0 %v1635
    %v1637 = vpop.xlane.xlu0 %1636
    %v1638 = vsel %vm208, %v1633, -inf
    %1639 = vmax.xlane.f32.xlu0 %v1638
    %v1640 = vpop.xlane.xlu0 %1639
    %v1641 = vsub.f32 %v1605, %v1637
    %v1642 = vsub.f32 %v1633, %v1640
    %v1643 = vmul.f32 %v1641, 1.442695
    %v1644 = vpow.pop %v1643
    %v1645 = vmul.f32 %v1642, 1.442695
    %v1646 = vpow.pop %v1645
    %v1647 = vsel %vm208, %v1644, 0.0
    %1648 = vadd.xlane.f32.xlu0 %v1647
    %v1649 = vpop.xlane.xlu0 %1648
    %v1650 = vsel %vm208, %v1646, 0.0
    %1651 = vadd.xlane.f32.xlu0 %v1650
    %v1652 = vpop.xlane.xlu0 %1651
    %v1653 = vrcp.pop %v1649
    %v1654 = vmul.f32 %v1649, %v1653
    %v1655 = vsub.f32 1.0, %v1654
    %v1656 = vmul.f32 %v1653, %v1655
    %v1657 = vadd.f32 %v1653, %v1656
    %vm1658 = vweird.f32 %v1649
    %vm1659 = vweird.f32 %v1653
    %vm1660 = vmor %vm1658, %vm1659
    %v1661 = vsel %vm1660, %v1653, %v1657
    %v1662 = vand.u32 2147483647, %v1649
    %vm1663 = vcmp.eq.f32.partialorder %v1662, 8.507059e+37
    %v1664 = vand.u32 %v1649, 2147483648
    %v1665 = vor.u32 1.1754944e-38, %v1664
    %v1666 = vsel %vm1663, %v1665, %v1661
    %v1667 = vmul.f32 %v1644, %v1666
    %v1668 = vrcp.pop %v1652
    %v1669 = vmul.f32 %v1652, %v1668
    %v1670 = vsub.f32 1.0, %v1669
    %v1671 = vmul.f32 %v1668, %v1670
    %v1672 = vadd.f32 %v1668, %v1671
    %vm1673 = vweird.f32 %v1652
    %vm1674 = vweird.f32 %v1668
    %vm1675 = vmor %vm1673, %vm1674
    %v1676 = vsel %vm1675, %v1668, %v1672
    %v1677 = vand.u32 2147483647, %v1652
    %vm1678 = vcmp.eq.f32.partialorder %v1677, 8.507059e+37
    %v1679 = vand.u32 %v1652, 2147483648
    %v1680 = vor.u32 1.1754944e-38, %v1679
    %v1681 = vsel %vm1678, %v1680, %v1676
    %v1682 = vmul.f32 %v1646, %v1681
    %1683 = vrot.lane.b32.xlu0 %v1108, 40
    %v1684 = vpop.permute.xlu0 %1683
    %v1687 = vsel %vm208, %v1667, 0
    %1689 = vmatpush.msra.mxu0 0.0
    %1690 = vmatpush.msra.mxu0 0.0
    %1691 = vmatpush.msra.mxu0 0.0
    %1692 = vmatpush.msra.mxu0 0.0
    %1693 = vmatpush.msra.mxu0 0.0
    %1694 = vmatpush.msra.mxu0 0.0
    %1695 = vmatpush.msra.mxu0 0.0
    %1696 = vmatpush.msra.mxu0 0.0
    %1697 = vmatpush.msra.mxu0 0.0
    %1698 = vmatpush.msra.mxu0 0.0
    %1699 = vmatpush.msra.mxu0 0.0
    %1700 = vmatpush.msra.mxu0 0.0
    %1701 = vmatpush.msra.mxu0 0.0
    %1702 = vmatpush.msra.mxu0 0.0
    %1703 = vmatpush.msra.mxu0 0.0
    %1704 = vmatpush.msra.mxu0 %v1684
    %1705 = vmatmul.f32.gmra.mxu0 %v1687
    %v1706 = vpop.f32.mrf.mxu0
    %v1707 = vadd.f32 0.0, %v1706
    %1708 = vdwg.mxu0
    %1709 = vrot.lane.b32.xlu0 %v1111, 40
    %v1710 = vpop.permute.xlu0 %1709
    %v1713 = vsel %vm208, %v1682, 0
    %1715 = vmatpush.msra.mxu0 0.0
    %1716 = vmatpush.msra.mxu0 0.0
    %1717 = vmatpush.msra.mxu0 0.0
    %1718 = vmatpush.msra.mxu0 0.0
    %1719 = vmatpush.msra.mxu0 0.0
    %1720 = vmatpush.msra.mxu0 0.0
    %1721 = vmatpush.msra.mxu0 0.0
    %1722 = vmatpush.msra.mxu0 0.0
    %1723 = vmatpush.msra.mxu0 0.0
    %1724 = vmatpush.msra.mxu0 0.0
    %1725 = vmatpush.msra.mxu0 0.0
    %1726 = vmatpush.msra.mxu0 0.0
    %1727 = vmatpush.msra.mxu0 0.0
    %1728 = vmatpush.msra.mxu0 0.0
    %1729 = vmatpush.msra.mxu0 0.0
    %1730 = vmatpush.msra.mxu0 %v1710
    %1731 = vmatmul.f32.gmra.mxu0 %v1713
    %v1732 = vpop.f32.mrf.mxu0
    %v1733 = vadd.f32 0.0, %v1732
    %1734 = vdwg.mxu0
    %1737 = vrot.lane.b32.xlu0 %v1395, 8
    %v1738 = vpop.permute.xlu0 %1737
    %1739 = vrot.lane.b32.xlu0 %v1421, 8
    %v1740 = vpop.permute.xlu0 %1739
    %1745 = vrot.lane.b32.xlu0 %v1551, 16
    %v1746 = vpop.permute.xlu0 %1745
    %1747 = vrot.lane.b32.xlu0 %v1577, 16
    %v1748 = vpop.permute.xlu0 %1747
    %1753 = vrot.lane.b32.xlu0 %v1707, 24
    %v1754 = vpop.permute.xlu0 %1753
    %1755 = vrot.lane.b32.xlu0 %v1733, 24
    %v1756 = vpop.permute.xlu0 %1755
    %v1759 = vsel %vm208, %v1239, %v1738
    %v1760 = vsel %vm208, %v1265, %v1740
    %v1761 = vsel %vm854, %v1759, %v1746
    %v1762 = vsel %vm854, %v1760, %v1748
    %v1763 = vsel %vm857, %v1761, %v1754
    %v1764 = vsel %vm857, %v1762, %v1756
    %s1765 = scalar_lea.vmem %s5, 32
    %v1766 = vld [vmem:[%s1765] sm:$0xff]
    %v1767 = vld [vmem:[%s1765 + $0x8] sm:$0xff]
    %v1768 = vld [vmem:[%s1765 + $0x10] sm:$0xff]
    %v1769 = vld [vmem:[%s1765 + $0x18] sm:$0xff]
    %v1771 = vsel %vm110, %v1763, 0
    %v1774 = vsel %vm110, %v1764, 0
    %1776 = vmatpush.msra.mxu0 0.0
    %1777 = vmatpush.msra.mxu0 0.0
    %1778 = vmatpush.msra.mxu0 0.0
    %1779 = vmatpush.msra.mxu0 0.0
    %1780 = vmatpush.msra.mxu0 0.0
    %1781 = vmatpush.msra.mxu0 0.0
    %1782 = vmatpush.msra.mxu0 0.0
    %1783 = vmatpush.msra.mxu0 0.0
    %1784 = vmatpush.msra.mxu0 0.0
    %1785 = vmatpush.msra.mxu0 0.0
    %1786 = vmatpush.msra.mxu0 0.0
    %1787 = vmatpush.msra.mxu0 0.0
    %1788 = vmatpush.msra.mxu0 %v1769
    %1789 = vmatpush.msra.mxu0 %v1768
    %1790 = vmatpush.msra.mxu0 %v1767
    %1791 = vmatpush.msra.mxu0 %v1766
    %1792 = vmatmul.f32.gmra.mxu0 %v1771
    %v1793 = vpop.f32.mrf.mxu0
    %v1794 = vadd.f32 0.0, %v1793
    %1795 = vmatmul.f32.gmra.mxu0 %v1774
    %v1796 = vpop.f32.mrf.mxu0
    %v1797 = vadd.f32 0.0, %v1796
    %1798 = vdwg.mxu0
    %v1799 = vadd.f32 %v1028, %v1794
    %v1800 = vadd.f32 %v1029, %v1797
    %s1801 = scalar_lea.vmem %s9, 1
    %v1802 = vld [vmem:[%s1801] sm:$0x1]
    %v1804 = vperm.slane %v1802, 0
    %v1806 = vadd.f32 %v1799, %v1804
    %v1807 = vadd.f32 %v1800, %v1804
    %v1808 = vsel %vm110, %v1806, 0.0
    %1809 = vadd.xlane.f32.xlu0 %v1808
    %v1810 = vpop.xlane.xlu0 %1809
    %v1811 = vsel %vm110, %v1807, 0.0
    %1812 = vadd.xlane.f32.xlu0 %v1811
    %v1813 = vpop.xlane.xlu0 %1812
    %v1814 = vmul.f32 %v1810, %v123
    %v1815 = vmul.f32 %v1813, %v123
    %v1816 = vsub.f32 %v1806, %v1814
    %v1817 = vsub.f32 %v1807, %v1815
    %v1818 = vmul.f32 %v1816, %v1816
    %v1819 = vmul.f32 %v1817, %v1817
    %v1820 = vsel %vm110, %v1818, 0.0
    %1821 = vadd.xlane.f32.xlu0 %v1820
    %v1822 = vpop.xlane.xlu0 %1821
    %v1823 = vsel %vm110, %v1819, 0.0
    %1824 = vadd.xlane.f32.xlu0 %v1823
    %v1825 = vpop.xlane.xlu0 %1824
    %v1826 = vmul.f32 %v1822, %v123
    %v1827 = vmul.f32 %v1825, %v123
    %v1828 = vadd.f32 %v1826, 1e-05
    %v1829 = vadd.f32 %v1827, 1e-05
    %v1830 = vrsqrt.pop %v1828
    %v1831 = vmul.f32 %v1830, %v1828
    %v1832 = vmul.f32 %v1831, %v1830
    %v1833 = vmul.f32 0.5, %v1832
    %v1834 = vsub.f32 1.5, %v1833
    %v1835 = vmul.f32 %v1830, %v1834
    %vm1836 = vweird.f32 %v1828
    %vm1837 = vweird.f32 %v1830
    %vm1838 = vmor %vm1836, %vm1837
    %v1839 = vsel %vm1838, %v1830, %v1835
    %v1840 = vrsqrt.pop %v1829
    %v1841 = vmul.f32 %v1840, %v1829
    %v1842 = vmul.f32 %v1841, %v1840
    %v1843 = vmul.f32 0.5, %v1842
    %v1844 = vsub.f32 1.5, %v1843
    %v1845 = vmul.f32 %v1840, %v1844
    %vm1846 = vweird.f32 %v1829
    %vm1847 = vweird.f32 %v1840
    %vm1848 = vmor %vm1846, %vm1847
    %v1849 = vsel %vm1848, %v1840, %v1845
    %v1850 = vmul.f32 %v1816, %v1839
    %v1851 = vmul.f32 %v1817, %v1849
    %s1852 = scalar_lea.vmem %s6, 32
    %v1853 = vld [vmem:[%s1852] sm:$0xff]
    %v1854 = vld [vmem:[%s1852 + $0x8] sm:$0xff]
    %v1855 = vld [vmem:[%s1852 + $0x10] sm:$0xff]
    %v1856 = vld [vmem:[%s1852 + $0x18] sm:$0xff]
    %s1857 = scalar_lea.vmem %s10, 1
    %v1858 = vld [vmem:[%s1857] sm:$0x1]
    %v1860 = vperm.slane %v1858, 0
    %v1863 = vsel %vm110, %v1850, 0
    %v1866 = vsel %vm110, %v1851, 0
    %1868 = vmatpush.msra.mxu0 0.0
    %1869 = vmatpush.msra.mxu0 0.0
    %1870 = vmatpush.msra.mxu0 0.0
    %1871 = vmatpush.msra.mxu0 0.0
    %1872 = vmatpush.msra.mxu0 0.0
    %1873 = vmatpush.msra.mxu0 0.0
    %1874 = vmatpush.msra.mxu0 0.0
    %1875 = vmatpush.msra.mxu0 0.0
    %1876 = vmatpush.msra.mxu0 0.0
    %1877 = vmatpush.msra.mxu0 0.0
    %1878 = vmatpush.msra.mxu0 0.0
    %1879 = vmatpush.msra.mxu0 0.0
    %1880 = vmatpush.msra.mxu0 %v1856
    %1881 = vmatpush.msra.mxu0 %v1855
    %1882 = vmatpush.msra.mxu0 %v1854
    %1883 = vmatpush.msra.mxu0 %v1853
    %1884 = vmatmul.f32.gmra.mxu0 %v1863
    %v1885 = vpop.f32.mrf.mxu0
    %v1886 = vadd.f32 %v1860, %v1885
    %1887 = vmatmul.f32.gmra.mxu0 %v1866
    %v1888 = vpop.f32.mrf.mxu0
    %v1889 = vadd.f32 %v1860, %v1888
    %1890 = vdwg.mxu0
    %v1891 = vmax.f32 %v1886, 0.0
    %v1892 = vmax.f32 %v1889, 0.0
    %s1893 = scalar_lea.vmem %s7, 64
    %v1894 = vld [vmem:[%s1893] sm:$0xff]
    %v1895 = vld [vmem:[%s1893 + $0x8] sm:$0xff]
    %v1896 = vld [vmem:[%s1893 + $0x10] sm:$0xff]
    %v1897 = vld [vmem:[%s1893 + $0x18] sm:$0xff]
    %v1898 = vld [vmem:[%s1893 + $0x20] sm:$0xff]
    %v1899 = vld [vmem:[%s1893 + $0x28] sm:$0xff]
    %v1900 = vld [vmem:[%s1893 + $0x30] sm:$0xff]
    %v1901 = vld [vmem:[%s1893 + $0x38] sm:$0xff]
    %v1903 = vsel %vm992, %v1891, 0
    %v1906 = vsel %vm992, %v1892, 0
    %1908 = vmatpush.msra.mxu0 0.0
    %1909 = vmatpush.msra.mxu0 0.0
    %1910 = vmatpush.msra.mxu0 0.0
    %1911 = vmatpush.msra.mxu0 0.0
    %1912 = vmatpush.msra.mxu0 0.0
    %1913 = vmatpush.msra.mxu0 0.0
    %1914 = vmatpush.msra.mxu0 0.0
    %1915 = vmatpush.msra.mxu0 0.0
    %1916 = vmatpush.msra.mxu0 %v1901
    %1917 = vmatpush.msra.mxu0 %v1900
    %1918 = vmatpush.msra.mxu0 %v1899
    %1919 = vmatpush.msra.mxu0 %v1898
    %1920 = vmatpush.msra.mxu0 %v1897
    %1921 = vmatpush.msra.mxu0 %v1896
    %1922 = vmatpush.msra.mxu0 %v1895
    %1923 = vmatpush.msra.mxu0 %v1894
    %1924 = vmatmul.f32.gmra.mxu0 %v1903
    %v1925 = vpop.f32.mrf.mxu0
    %v1926 = vadd.f32 0.0, %v1925
    %1927 = vmatmul.f32.gmra.mxu0 %v1906
    %v1928 = vpop.f32.mrf.mxu0
    %v1929 = vadd.f32 0.0, %v1928
    %1930 = vdwg.mxu0
    %v1931 = vadd.f32 %v1806, %v1926
    %v1932 = vadd.f32 %v1807, %v1929
    %s1933 = scalar_lea.vmem %s11, 1
    %v1934 = vld [vmem:[%s1933] sm:$0x1]
    %v1936 = vperm.slane %v1934, 0
    %v1938 = vadd.f32 %v1931, %v1936
    %v1939 = vadd.f32 %v1932, %v1936
    %v1940 = vsel %vm110, %v1938, 0.0
    %1941 = vadd.xlane.f32.xlu0 %v1940
    %v1942 = vpop.xlane.xlu0 %1941
    %v1943 = vsel %vm110, %v1939, 0.0
    %1944 = vadd.xlane.f32.xlu0 %v1943
    %v1945 = vpop.xlane.xlu0 %1944
    %v1946 = vmul.f32 %v1942, %v123
    %v1947 = vmul.f32 %v1945, %v123
    %v1948 = vsub.f32 %v1938, %v1946
    %v1949 = vsub.f32 %v1939, %v1947
    %v1950 = vmul.f32 %v1948, %v1948
    %v1951 = vmul.f32 %v1949, %v1949
    %v1952 = vsel %vm110, %v1950, 0.0
    %1953 = vadd.xlane.f32.xlu0 %v1952
    %v1954 = vpop.xlane.xlu0 %1953
    %v1955 = vsel %vm110, %v1951, 0.0
    %1956 = vadd.xlane.f32.xlu0 %v1955
    %v1957 = vpop.xlane.xlu0 %1956
    %v1958 = vmul.f32 %v1954, %v123
    %v1959 = vmul.f32 %v1957, %v123
    %v1960 = vadd.f32 %v1958, 1e-05
    %v1961 = vadd.f32 %v1959, 1e-05
    %v1962 = vrsqrt.pop %v1960
    %v1963 = vmul.f32 %v1962, %v1960
    %v1964 = vmul.f32 %v1963, %v1962
    %v1965 = vmul.f32 0.5, %v1964
    %v1966 = vsub.f32 1.5, %v1965
    %v1967 = vmul.f32 %v1962, %v1966
    %vm1968 = vweird.f32 %v1960
    %vm1969 = vweird.f32 %v1962
    %vm1970 = vmor %vm1968, %vm1969
    %v1971 = vsel %vm1970, %v1962, %v1967
    %v1972 = vrsqrt.pop %v1961
    %v1973 = vmul.f32 %v1972, %v1961
    %v1974 = vmul.f32 %v1973, %v1972
    %v1975 = vmul.f32 0.5, %v1974
    %v1976 = vsub.f32 1.5, %v1975
    %v1977 = vmul.f32 %v1972, %v1976
    %vm1978 = vweird.f32 %v1961
    %vm1979 = vweird.f32 %v1972
    %vm1980 = vmor %vm1978, %vm1979
    %v1981 = vsel %vm1980, %v1972, %v1977
    %v1982 = vmul.f32 %v1948, %v1971
    %v1983 = vmul.f32 %v1949, %v1981
    %v1984 = vld [vmem:[%s12] sm:$0x1]
    %v1986 = vperm.slane %v1984, 0
    %v1988 = vmul.f32 %v1982, %v1986
    %v1989 = vmul.f32 %v1983, %v1986
    %s1990 = scalar_lea.vmem %s12, 1
    %v1991 = vld [vmem:[%s1990] sm:$0x1]
    %v1993 = vperm.slane %v1991, 0
    %v1995 = vadd.f32 %v1988, %v1993
    %v1996 = vadd.f32 %v1989, %v1993
    %1997 = vst.msk [vmem:[#allocation2] sm:$0xff] %vm110, %v1995
    %1998 = vst.msk [vmem:[#allocation2 + $0x8] sm:$0xff] %vm110, %v1996
    // Predicated region
    $region54: #{run_encoder.1} parent=1 // pred_check
      _
    $region55: #{run_encoder.1} parent=1 // pred_check_branch
      %2000 = sbr.rel (0) target = $region57
    $region56: #{run_encoder.1} parent=1 // pred_region
      %2002 = vsyncadd [#allocation3], 0
      %s2003 = sshll.u32 [#allocation2], 4
      %s2004 = int_to_ptr.vmem [resolvable:$true] %s2003
      %s2005 = sshll.u32 %s13, 4
      %s2006 = int_to_ptr.hbm [resolvable:$true] %s2005
      %2011 = dma.vmem_to_hbm [thread:$0]  %s2004, 256, %s2006, [#allocation3], 128, 128, 8
    $region57: #{run_encoder.1} parent=1 // pred_fallthru
      _
    // Predicated region
    $region58: #{run_encoder.1} parent=1 // pred_check
      _
    $region59: #{run_encoder.1} parent=1 // pred_check_branch
      %2013 = sbr.rel (0) target = $region61
    $region60: #{run_encoder.1} parent=1 // pred_region
      %2015 = dma.done [#allocation3], 256
    $region61: #{run_encoder.1} parent=1 // pred_fallthru
      _
    %2016 = vsyncpa [#allocation3], 1

</llo_original>
